<compile_context>
chip_gen: v5e
topology: v5e:2x2
jax: 0.10.0
libtpu: 0.0.40
codegen_flags: <defaults>
</compile_context>

<pallas_src>
import functools

import numpy as np
import jax
import jax.numpy as jnp
from jax.experimental import pallas as pl
from jax.experimental.pallas import tpu as pltpu

EPS = 1e-5


# ----------------------------------------------------------------------------
# Parameter init (PyTorch conv/bn layouts).
# ----------------------------------------------------------------------------
def _conv_w(key, cout, cin, kh, kw):
    bound = 1.0 / float(cin * kh * kw) ** 0.5
    return jax.random.uniform(key, (cout, cin, kh, kw), jnp.float32, -bound, bound)


def _bn_params(key, c):
    k1, k2, k3, k4 = jax.random.split(key, 4)
    gamma = jax.random.uniform(k1, (c,), jnp.float32, 0.5, 1.5)
    beta = jax.random.uniform(k2, (c,), jnp.float32, -0.5, 0.5)
    mean = jax.random.uniform(k3, (c,), jnp.float32, -0.5, 0.5)
    var = jax.random.uniform(k4, (c,), jnp.float32, 0.5, 1.5)
    return gamma, beta, mean, var


def init_xblock_raw(key, in_ch, out_ch, stride, bottleneck_ratio, group_width, se_ratio):
    inner = out_ch // bottleneck_ratio
    keys = jax.random.split(key, 12)
    p = {}
    p["w1"] = _conv_w(keys[0], inner, in_ch, 1, 1)
    p["bn1"] = _bn_params(keys[1], inner)
    p["w2"] = _conv_w(keys[2], inner, group_width, 3, 3)        # grouped 3x3
    p["bn2"] = _bn_params(keys[3], inner)
    p["w3"] = _conv_w(keys[4], out_ch, inner, 1, 1)
    p["bn3"] = _bn_params(keys[5], out_ch)
    if se_ratio is not None:
        se_c = int(inner * se_ratio)
        p["se_w1"] = _conv_w(keys[6], se_c, inner, 1, 1)
        p["se_b1"] = jax.random.uniform(keys[7], (se_c,), jnp.float32, -0.1, 0.1)
        p["se_w2"] = _conv_w(keys[8], inner, se_c, 1, 1)
        p["se_b2"] = jax.random.uniform(keys[9], (inner,), jnp.float32, -0.1, 0.1)
    if stride != 1 or in_ch != out_ch:
        p["ws"] = _conv_w(keys[10], out_ch, in_ch, 1, 1)
        p["bns"] = _bn_params(keys[11], out_ch)
    return p


# ----------------------------------------------------------------------------
# One-time weight preprocessing (hoisted out of the forward path).
# ----------------------------------------------------------------------------
def _bn_fold(bn):
    gamma, beta, mean, var = bn
    scale = gamma / jnp.sqrt(var + EPS)
    bias = beta - mean * scale
    return scale, bias


def _pack_grouped_w2(w2, groups, scale):
    """(Ci, Ci/g, 3, 3) grouped weight -> (Ci, 9*Ci) per-tap block-diagonal dense,
    with the BN scale folded into the output-channel rows."""
    Ci, cig = w2.shape[0], w2.shape[1]
    taps = []
    for k in range(9):
        ky, kx = k // 3, k % 3
        dense = jnp.zeros((Ci, Ci), jnp.float32)
        for g in range(groups):
            dense = dense.at[g * cig:(g + 1) * cig, g * cig:(g + 1) * cig].set(
                w2[g * cig:(g + 1) * cig, :, ky, kx])
        taps.append(dense)
    return scale[:, None] * jnp.concatenate(taps, axis=1)


def _build_tap_masks(cfg, Nb):
    """Per-tap 0/1 validity masks over the output lane index (host-precomputed)."""
    H, W, s = cfg["H"], cfg["W"], cfg["stride"]
    Ho, Wo = H // s, W // s
    L = Nb * Ho * Wo
    j = np.arange(L)
    a = (j // Wo) % Ho
    b = j % Wo
    m = np.zeros((9, L), np.float32)
    for k in range(9):
        ky, kx = k // 3, k % 3
        if s == 1:
            dy, dx = ky - 1, kx - 1
            valid = (a + dy >= 0) & (a + dy < Ho) & (b + dx >= 0) & (b + dx < Wo)
        else:  # stride 2: polyphase component shift by (di, dj) in {-1, 0}
            di = -1 if ky == 0 else 0
            dj = -1 if kx == 0 else 0
            valid = (a + di >= 0) & (b + dj >= 0)
        m[k] = valid
    return jnp.asarray(m).astype(jnp.bfloat16)


def _build_pool_matrix(Nb, Ho, Wo):
    """Block-diagonal per-image averaging matrix (L, L): SE GAP as one matmul."""
    L = Nb * Ho * Wo
    img = np.arange(L) // (Ho * Wo)
    pool = (img[:, None] == img[None, :]).astype(np.float32) / float(Ho * Wo)
    return jnp.asarray(pool).astype(jnp.bfloat16)


def prepare_block(raw, cfg, Nb):
    """bf16 scale-folded matmul weights + one packed f32 bias slab + tap masks."""
    Ci, Cout = cfg["ci"], cfg["cout"]
    s1, b1 = _bn_fold(raw["bn1"])
    s2, b2 = _bn_fold(raw["bn2"])
    s3, b3 = _bn_fold(raw["bn3"])
    ops = {}
    ops["w1"] = (s1[:, None] * raw["w1"][:, :, 0, 0]).astype(jnp.bfloat16)      # (Ci, Cin)
    ops["w2p"] = _pack_grouped_w2(raw["w2"], cfg["groups"], s2).astype(jnp.bfloat16)  # (Ci, 9Ci)
    ops["w3"] = (s3[:, None] * raw["w3"][:, :, 0, 0]).astype(jnp.bfloat16)      # (Cout, Ci)
    bias_cols = [b1, b2]
    if cfg["has_se"]:
        sec, secp = cfg["sec"], cfg["sec_pad"]
        sew1 = jnp.zeros((secp, Ci), jnp.float32).at[:sec].set(raw["se_w1"][:, :, 0, 0])
        sew2 = jnp.zeros((Ci, secp), jnp.float32).at[:, :sec].set(raw["se_w2"][:, :, 0, 0])
        seb1 = jnp.zeros((secp,), jnp.float32).at[:sec].set(raw["se_b1"])
        ops["sew1"] = sew1.astype(jnp.bfloat16)                                 # (secp, Ci)
        ops["sew2"] = sew2.astype(jnp.bfloat16)                                 # (Ci, secp)
        bias_cols += [seb1, raw["se_b2"]]
    bias_cols.append(b3)
    if cfg["has_proj"]:
        ss, bs = _bn_fold(raw["bns"])
        ops["ws"] = (ss[:, None] * raw["ws"][:, :, 0, 0]).astype(jnp.bfloat16)  # (Cout, Cin)
        bias_cols.append(bs)
    rows = max(8, Ci, Cout, cfg["sec_pad"])
    slab = jnp.zeros((rows, len(bias_cols)), jnp.float32)
    for i, v in enumerate(bias_cols):
        slab = slab.at[: v.shape[0], i].set(v)
    ops["bias"] = slab
    ops["mask"] = _build_tap_masks(cfg, Nb)
    return ops


def build_stage(key, in_ch, out_ch, num_blocks, stride, bottleneck_ratio,
                group_width, se_ratio, H, W, Nb):
    keys = jax.random.split(key, num_blocks)
    inner = out_ch // bottleneck_ratio
    groups = inner // group_width
    sec = int(inner * se_ratio) if se_ratio is not None else 0
    sec_pad = ((sec + 7) // 8) * 8 if sec else 0
    cfgs, blocks = [], []
    cur_h, cur_w, cin = H, W, in_ch
    for i in range(num_blocks):
        s = stride if i == 0 else 1
        cfg = dict(stride=s, H=cur_h, W=cur_w, cin=cin, cout=out_ch, ci=inner,
                   groups=groups, sec=sec, sec_pad=sec_pad,
                   has_se=se_ratio is not None,
                   has_proj=(s != 1 or cin != out_ch))
        raw = init_xblock_raw(keys[i], cin, out_ch, s, bottleneck_ratio,
                              group_width, se_ratio)
        blocks.append(prepare_block(raw, cfg, Nb))
        cfgs.append(cfg)
        cur_h //= s
        cur_w //= s
        cin = out_ch
    shared = {"pb": _build_pool_matrix(Nb, cur_h, cur_w)}
    return cfgs, {"blocks": blocks, "shared": shared}


# ----------------------------------------------------------------------------
# Fused Stage Pallas kernel.
# ----------------------------------------------------------------------------
def _block_op_names(cfg):
    names = ["w1", "w2p", "w3"]
    if cfg["has_se"]:
        names += ["sew1", "sew2"]
    if cfg["has_proj"]:
        names += ["ws"]
    names += ["bias", "mask"]
    return names


def _make_stage_kernel(cfgs, Nb):
    def kernel(*refs):
        it = iter(refs)
        x_ref = next(it)
        pb_ref = next(it)
        block_refs = []
        for cfg in cfgs:
            block_refs.append({name: next(it) for name in _block_op_names(cfg)})
        o_ref = next(it)

        def mm(a, b):
            return jnp.dot(a.astype(jnp.bfloat16), b.astype(jnp.bfloat16),
                           preferred_element_type=jnp.float32)

        pb = pb_ref[...]                                   # (L, L) per-image GAP matrix
        cur = x_ref[...]                                   # first-block input (bf16)

        for bi, cfg in enumerate(cfgs):
            r = block_refs[bi]
            Ci, Cout = cfg["ci"], cfg["cout"]
            Ho, Wo = cfg["H"] // cfg["stride"], cfg["W"] // cfg["stride"]
            L = Nb * Ho * Wo

            bias = r["bias"][...]                          # (rows, nbias) f32 slab
            masks = r["mask"][...]                         # (9, L) bf16 0/1

            c = 0
            b1 = bias[0:Ci, c:c + 1]; c += 1
            b2 = bias[0:Ci, c:c + 1]; c += 1
            if cfg["has_se"]:
                seb1 = bias[0:cfg["sec_pad"], c:c + 1]; c += 1
                seb2 = bias[0:Ci, c:c + 1]; c += 1
            b3 = bias[0:Cout, c:c + 1]; c += 1
            if cfg["has_proj"]:
                bs = bias[0:Cout, c:c + 1]; c += 1

            # ---- conv1 (1x1) + folded BN + ReLU ------------------------------
            x1 = jnp.maximum(mm(r["w1"][...], cur) + b1, 0.0).astype(jnp.bfloat16)

            # ---- conv2 (grouped 3x3) as ONE im2col matmul (K = 9*Ci) ---------
            slabs = []
            if cfg["stride"] == 1:
                for k in range(9):
                    ky, kx = k // 3, k % 3
                    st = (ky - 1) * Wo + (kx - 1)
                    sh = x1 if st == 0 else jnp.roll(x1, -st, axis=1)
                    if ky != 1 or kx != 1:                 # border taps need masking
                        sh = sh * masks[k:k + 1, :]
                    slabs.append(sh)
                shortcut_src = cur
            else:
                # stride 2: `cur` is polyphase-reordered (Cin, 4*L); component
                # (r, q) holds x[..., 2a+r, 2b+q], so every tap is an unstrided
                # lane roll of one component.
                comps = [x1[:, ci * L:(ci + 1) * L] for ci in range(4)]
                for k in range(9):
                    ky, kx = k // 3, k % 3
                    di, rr = (-1, 1) if ky == 0 else (0, ky - 1)
                    dj, qq = (-1, 1) if kx == 0 else (0, kx - 1)
                    comp = comps[rr * 2 + qq]
                    st = di * Wo + dj
                    sh = comp if st == 0 else jnp.roll(comp, -st, axis=1)
                    if di != 0 or dj != 0:
                        sh = sh * masks[k:k + 1, :]
                    slabs.append(sh)
                shortcut_src = cur[:, 0:L]                 # phase (0,0) == x[:, ::2, ::2]

            xcol = jnp.concatenate(slabs, axis=0)          # (9*Ci, L) bf16
            x2 = jnp.maximum(mm(r["w2p"][...], xcol) + b2, 0.0)

            # ---- squeeze-excite (per-image GAP via pooling matmul) -----------
            if cfg["has_se"]:
                pooled = mm(x2, pb)                        # per-image mean, lane-broadcast
                hid = jnp.maximum(mm(r["sew1"][...], pooled) + seb1, 0.0)
                se = jax.nn.sigmoid(mm(r["sew2"][...], hid) + seb2)
                x2 = x2 * se

            # ---- conv3 (1x1) + folded BN + ReLU (ReLU is in the reference) ---
            x3 = jnp.maximum(mm(r["w3"][...], x2) + b3, 0.0)

            # ---- shortcut + residual ReLU ------------------------------------
            if cfg["has_proj"]:
                sc = mm(r["ws"][...], shortcut_src) + bs   # 1x1 (strided) conv + BN
            else:
                sc = shortcut_src.astype(jnp.float32)      # identity shortcut

            cur = jnp.maximum(x3 + sc, 0.0)                # (Cout, L) f32

        o_ref[...] = cur.astype(o_ref.dtype)               # lane-dense (Cout, 128) store

    return kernel


# ----------------------------------------------------------------------------
# Stage forward: NCHW in -> NCHW out; the whole stage is ONE pallas_call.
# ----------------------------------------------------------------------------
def stage_forward(cfgs, ops, x_nchw):
    Nb, Cin, H, W = x_nchw.shape
    assert all(c["stride"] == 1 for c in cfgs[1:])
    if cfgs[0]["stride"] == 2:
        Ho, Wo = H // 2, W // 2
        xk = x_nchw.reshape(Nb, Cin, Ho, 2, Wo, 2)
        xk = jnp.transpose(xk, (1, 3, 5, 0, 2, 4)).reshape(Cin, 4 * Nb * Ho * Wo)
    else:
        xk = jnp.transpose(x_nchw, (1, 0, 2, 3)).reshape(Cin, Nb * H * W)
    xk = xk.astype(jnp.bfloat16)

    flat = [ops["shared"]["pb"]]
    for cfg, blk in zip(cfgs, ops["blocks"]):
        flat += [blk[n] for n in _block_op_names(cfg)]

    Hs, Ws = H, W
    for cfg in cfgs:
        Hs //= cfg["stride"]
        Ws //= cfg["stride"]
    Cout = cfgs[-1]["cout"]
    L = Nb * Hs * Ws

    def _spec(a):
        nd = a.ndim
        return pl.BlockSpec(a.shape, lambda i, _nd=nd: (0,) * _nd)

    out = pl.pallas_call(
        _make_stage_kernel(cfgs, Nb),
        out_shape=jax.ShapeDtypeStruct((Cout, L), jnp.float32),
        grid=(1,),
        in_specs=[_spec(xk)] + [_spec(a) for a in flat],
        out_specs=pl.BlockSpec((Cout, L), lambda i: (0, 0)),
        compiler_params=pltpu.CompilerParams(
            dimension_semantics=("arbitrary",)),
    )(xk, *flat)

    y = out.reshape(Cout, Nb, Hs, Ws)
    return jnp.transpose(y, (1, 0, 2, 3))                  # NCHW f32


# ----------------------------------------------------------------------------
if __name__ == "__main__":
    key = jax.random.PRNGKey(0)
    kx, kp = jax.random.split(key)

    # Stage config: in=16 -> out=32, 2 blocks, first stride 2, bottleneck 2,
    # group_width 8 (inner=16, 2 groups), se_ratio 0.25 (se_channels=4).
    Nb, Cin, H, W = 2, 16, 16, 16
    out_ch, num_blocks, stride = 32, 2, 2
    bottleneck_ratio, group_width, se_ratio = 2, 8, 0.25

    x = jax.random.normal(kx, (Nb, Cin, H, W), jnp.float32)        # NCHW input
    cfgs, ops = build_stage(kp, Cin, out_ch, num_blocks, stride,
                            bottleneck_ratio, group_width, se_ratio, H, W, Nb)

    stage_fn = jax.jit(functools.partial(stage_forward, cfgs))
    y = jax.block_until_ready(stage_fn(ops, x))

    assert y.shape == (Nb, out_ch, H // stride, W // stride), y.shape
    assert bool(jnp.all(jnp.isfinite(y)))
    assert bool(jnp.all(y >= 0.0))          # final ReLU
    print("KERNEL_OK")
</pallas_src>

<mosaic_0001>
module attributes {stable_mosaic.version = 11 : i64} {
  func.func @kernel(%arg0: i32, %arg1: memref<16x512xbf16, #tpu.memory_space<vmem>>, %arg2: memref<128x128xbf16, #tpu.memory_space<vmem>>, %arg3: memref<16x16xbf16, #tpu.memory_space<vmem>>, %arg4: memref<16x144xbf16, #tpu.memory_space<vmem>>, %arg5: memref<32x16xbf16, #tpu.memory_space<vmem>>, %arg6: memref<8x16xbf16, #tpu.memory_space<vmem>>, %arg7: memref<16x8xbf16, #tpu.memory_space<vmem>>, %arg8: memref<32x16xbf16, #tpu.memory_space<vmem>>, %arg9: memref<32x6xf32, #tpu.memory_space<vmem>>, %arg10: memref<9x128xbf16, #tpu.memory_space<vmem>>, %arg11: memref<16x32xbf16, #tpu.memory_space<vmem>>, %arg12: memref<16x144xbf16, #tpu.memory_space<vmem>>, %arg13: memref<32x16xbf16, #tpu.memory_space<vmem>>, %arg14: memref<8x16xbf16, #tpu.memory_space<vmem>>, %arg15: memref<16x8xbf16, #tpu.memory_space<vmem>>, %arg16: memref<32x5xf32, #tpu.memory_space<vmem>>, %arg17: memref<9x128xbf16, #tpu.memory_space<vmem>>, %arg18: memref<32x128xf32, #tpu.memory_space<vmem>>) attributes {dimension_semantics = [#tpu.dimension_semantics<arbitrary>], iteration_bounds = array<i64: 1>, scalar_prefetch = 0 : i64, scratch_operands = 0 : i64, tpu.core_type = #tpu.core_type<tc>, window_params = [{pipeline_mode = #tpu.pipeline_mode<synchronous>, transform_indices = @transform_0, window_bounds = array<i64: 16, 512>}, {pipeline_mode = #tpu.pipeline_mode<synchronous>, transform_indices = @transform_1, window_bounds = array<i64: 128, 128>}, {pipeline_mode = #tpu.pipeline_mode<synchronous>, transform_indices = @transform_2, window_bounds = array<i64: 16, 16>}, {pipeline_mode = #tpu.pipeline_mode<synchronous>, transform_indices = @transform_3, window_bounds = array<i64: 16, 144>}, {pipeline_mode = #tpu.pipeline_mode<synchronous>, transform_indices = @transform_4, window_bounds = array<i64: 32, 16>}, {pipeline_mode = #tpu.pipeline_mode<synchronous>, transform_indices = @transform_5, window_bounds = array<i64: 8, 16>}, {pipeline_mode = #tpu.pipeline_mode<synchronous>, transform_indices = @transform_6, window_bounds = array<i64: 16, 8>}, {pipeline_mode = #tpu.pipeline_mode<synchronous>, transform_indices = @transform_7, window_bounds = array<i64: 32, 16>}, {pipeline_mode = #tpu.pipeline_mode<synchronous>, transform_indices = @transform_8, window_bounds = array<i64: 32, 6>}, {pipeline_mode = #tpu.pipeline_mode<synchronous>, transform_indices = @transform_9, window_bounds = array<i64: 9, 128>}, {pipeline_mode = #tpu.pipeline_mode<synchronous>, transform_indices = @transform_10, window_bounds = array<i64: 16, 32>}, {pipeline_mode = #tpu.pipeline_mode<synchronous>, transform_indices = @transform_11, window_bounds = array<i64: 16, 144>}, {pipeline_mode = #tpu.pipeline_mode<synchronous>, transform_indices = @transform_12, window_bounds = array<i64: 32, 16>}, {pipeline_mode = #tpu.pipeline_mode<synchronous>, transform_indices = @transform_13, window_bounds = array<i64: 8, 16>}, {pipeline_mode = #tpu.pipeline_mode<synchronous>, transform_indices = @transform_14, window_bounds = array<i64: 16, 8>}, {pipeline_mode = #tpu.pipeline_mode<synchronous>, transform_indices = @transform_15, window_bounds = array<i64: 32, 5>}, {pipeline_mode = #tpu.pipeline_mode<synchronous>, transform_indices = @transform_16, window_bounds = array<i64: 9, 128>}, {pipeline_mode = #tpu.pipeline_mode<synchronous>, transform_indices = @transform_17, window_bounds = array<i64: 32, 128>}]} {
    %c0 = arith.constant 0 : index
    %c0_0 = arith.constant 0 : index
    %0 = vector.load %arg2[%c0, %c0_0] : memref<128x128xbf16, #tpu.memory_space<vmem>>, vector<128x128xbf16>
    %c0_1 = arith.constant 0 : index
    %c0_2 = arith.constant 0 : index
    %1 = vector.load %arg1[%c0_1, %c0_2] : memref<16x512xbf16, #tpu.memory_space<vmem>>, vector<16x512xbf16>
    %c0_3 = arith.constant 0 : index
    %c0_4 = arith.constant 0 : index
    %2 = vector.load %arg9[%c0_3, %c0_4] : memref<32x6xf32, #tpu.memory_space<vmem>>, vector<32x6xf32>
    %c0_5 = arith.constant 0 : index
    %c0_6 = arith.constant 0 : index
    %3 = vector.load %arg10[%c0_5, %c0_6] : memref<9x128xbf16, #tpu.memory_space<vmem>>, vector<9x128xbf16>
    %4 = vector.extract_strided_slice %2 {offsets = [0, 0], sizes = [16, 1], strides = [1, 1]} : vector<32x6xf32> to vector<16x1xf32>
    %5 = vector.extract_strided_slice %2 {offsets = [0, 1], sizes = [16, 1], strides = [1, 1]} : vector<32x6xf32> to vector<16x1xf32>
    %6 = vector.extract_strided_slice %2 {offsets = [0, 2], sizes = [8, 1], strides = [1, 1]} : vector<32x6xf32> to vector<8x1xf32>
    %7 = vector.extract_strided_slice %2 {offsets = [0, 3], sizes = [16, 1], strides = [1, 1]} : vector<32x6xf32> to vector<16x1xf32>
    %8 = vector.extract_strided_slice %2 {offsets = [0, 4], sizes = [32, 1], strides = [1, 1]} : vector<32x6xf32> to vector<32x1xf32>
    %9 = vector.extract_strided_slice %2 {offsets = [0, 5], sizes = [32, 1], strides = [1, 1]} : vector<32x6xf32> to vector<32x1xf32>
    %c0_7 = arith.constant 0 : index
    %c0_8 = arith.constant 0 : index
    %10 = vector.load %arg3[%c0_7, %c0_8] : memref<16x16xbf16, #tpu.memory_space<vmem>>, vector<16x16xbf16>
    %cst = arith.constant dense<0.000000e+00> : vector<16x512xf32>
    %11 = tpu.matmul %10, %1, %cst {dimension_numbers = #tpu.dot_dimension_numbers<[1], [0], [0], [1], [0, 0, 1, 1], [], []>} : vector<16x16xbf16>, vector<16x512xbf16>, vector<16x512xf32> -> vector<16x512xf32>
    %12 = vector.broadcast %4 : vector<16x1xf32> to vector<16x512xf32>
    %13 = arith.addf %11, %12 : vector<16x512xf32>
    %cst_9 = arith.constant 0.000000e+00 : f32
    %14 = vector.broadcast %cst_9 : f32 to vector<16x512xf32>
    %15 = arith.maximumf %13, %14 : vector<16x512xf32>
    %16 = arith.truncf %15 : vector<16x512xf32> to vector<16x512xbf16>
    %17 = vector.extract_strided_slice %16 {offsets = [0, 0], sizes = [16, 128], strides = [1, 1]} : vector<16x512xbf16> to vector<16x128xbf16>
    %18 = vector.extract_strided_slice %16 {offsets = [0, 128], sizes = [16, 128], strides = [1, 1]} : vector<16x512xbf16> to vector<16x128xbf16>
    %19 = vector.extract_strided_slice %16 {offsets = [0, 256], sizes = [16, 128], strides = [1, 1]} : vector<16x512xbf16> to vector<16x128xbf16>
    %20 = vector.extract_strided_slice %16 {offsets = [0, 384], sizes = [16, 128], strides = [1, 1]} : vector<16x512xbf16> to vector<16x128xbf16>
    %21 = vector.extract_strided_slice %20 {offsets = [0, 119], sizes = [16, 9], strides = [1, 1]} : vector<16x128xbf16> to vector<16x9xbf16>
    %22 = vector.extract_strided_slice %20 {offsets = [0, 0], sizes = [16, 119], strides = [1, 1]} : vector<16x128xbf16> to vector<16x119xbf16>
    %23 = tpu.concatenate %21, %22 in 1 : vector<16x9xbf16>, vector<16x119xbf16> -> vector<16x128xbf16>
    %24 = vector.extract_strided_slice %3 {offsets = [0, 0], sizes = [1, 128], strides = [1, 1]} : vector<9x128xbf16> to vector<1x128xbf16>
    %25 = vector.broadcast %24 : vector<1x128xbf16> to vector<16x128xbf16>
    %26 = arith.mulf %23, %25 : vector<16x128xbf16>
    %27 = vector.extract_strided_slice %19 {offsets = [0, 120], sizes = [16, 8], strides = [1, 1]} : vector<16x128xbf16> to vector<16x8xbf16>
    %28 = vector.extract_strided_slice %19 {offsets = [0, 0], sizes = [16, 120], strides = [1, 1]} : vector<16x128xbf16> to vector<16x120xbf16>
    %29 = tpu.concatenate %27, %28 in 1 : vector<16x8xbf16>, vector<16x120xbf16> -> vector<16x128xbf16>
    %30 = vector.extract_strided_slice %3 {offsets = [1, 0], sizes = [1, 128], strides = [1, 1]} : vector<9x128xbf16> to vector<1x128xbf16>
    %31 = vector.broadcast %30 : vector<1x128xbf16> to vector<16x128xbf16>
    %32 = arith.mulf %29, %31 : vector<16x128xbf16>
    %33 = vector.extract_strided_slice %20 {offsets = [0, 120], sizes = [16, 8], strides = [1, 1]} : vector<16x128xbf16> to vector<16x8xbf16>
    %34 = vector.extract_strided_slice %20 {offsets = [0, 0], sizes = [16, 120], strides = [1, 1]} : vector<16x128xbf16> to vector<16x120xbf16>
    %35 = tpu.concatenate %33, %34 in 1 : vector<16x8xbf16>, vector<16x120xbf16> -> vector<16x128xbf16>
    %36 = vector.extract_strided_slice %3 {offsets = [2, 0], sizes = [1, 128], strides = [1, 1]} : vector<9x128xbf16> to vector<1x128xbf16>
    %37 = vector.broadcast %36 : vector<1x128xbf16> to vector<16x128xbf16>
    %38 = arith.mulf %35, %37 : vector<16x128xbf16>
    %39 = vector.extract_strided_slice %18 {offsets = [0, 127], sizes = [16, 1], strides = [1, 1]} : vector<16x128xbf16> to vector<16x1xbf16>
    %40 = vector.extract_strided_slice %18 {offsets = [0, 0], sizes = [16, 127], strides = [1, 1]} : vector<16x128xbf16> to vector<16x127xbf16>
    %41 = tpu.concatenate %39, %40 in 1 : vector<16x1xbf16>, vector<16x127xbf16> -> vector<16x128xbf16>
    %42 = vector.extract_strided_slice %3 {offsets = [3, 0], sizes = [1, 128], strides = [1, 1]} : vector<9x128xbf16> to vector<1x128xbf16>
    %43 = vector.broadcast %42 : vector<1x128xbf16> to vector<16x128xbf16>
    %44 = arith.mulf %41, %43 : vector<16x128xbf16>
    %45 = vector.extract_strided_slice %20 {offsets = [0, 127], sizes = [16, 1], strides = [1, 1]} : vector<16x128xbf16> to vector<16x1xbf16>
    %46 = vector.extract_strided_slice %20 {offsets = [0, 0], sizes = [16, 127], strides = [1, 1]} : vector<16x128xbf16> to vector<16x127xbf16>
    %47 = tpu.concatenate %45, %46 in 1 : vector<16x1xbf16>, vector<16x127xbf16> -> vector<16x128xbf16>
    %48 = vector.extract_strided_slice %3 {offsets = [6, 0], sizes = [1, 128], strides = [1, 1]} : vector<9x128xbf16> to vector<1x128xbf16>
    %49 = vector.broadcast %48 : vector<1x128xbf16> to vector<16x128xbf16>
    %50 = arith.mulf %47, %49 : vector<16x128xbf16>
    %51 = vector.extract_strided_slice %1 {offsets = [0, 0], sizes = [16, 128], strides = [1, 1]} : vector<16x512xbf16> to vector<16x128xbf16>
    %52 = tpu.concatenate %26, %32, %38, %44, %17, %18, %50, %19, %20 in 0 : vector<16x128xbf16>, vector<16x128xbf16>, vector<16x128xbf16>, vector<16x128xbf16>, vector<16x128xbf16>, vector<16x128xbf16>, vector<16x128xbf16>, vector<16x128xbf16>, vector<16x128xbf16> -> vector<144x128xbf16>
    %c0_10 = arith.constant 0 : index
    %c0_11 = arith.constant 0 : index
    %53 = vector.load %arg4[%c0_10, %c0_11] : memref<16x144xbf16, #tpu.memory_space<vmem>>, vector<16x144xbf16>
    %cst_12 = arith.constant dense<0.000000e+00> : vector<16x128xf32>
    %54 = tpu.matmul %53, %52, %cst_12 {dimension_numbers = #tpu.dot_dimension_numbers<[1], [0], [0], [1], [0, 0, 1, 1], [], []>} : vector<16x144xbf16>, vector<144x128xbf16>, vector<16x128xf32> -> vector<16x128xf32>
    %55 = vector.broadcast %5 : vector<16x1xf32> to vector<16x128xf32>
    %56 = arith.addf %54, %55 : vector<16x128xf32>
    %cst_13 = arith.constant 0.000000e+00 : f32
    %57 = vector.broadcast %cst_13 : f32 to vector<16x128xf32>
    %58 = arith.maximumf %56, %57 : vector<16x128xf32>
    %59 = arith.truncf %58 : vector<16x128xf32> to vector<16x128xbf16>
    %cst_14 = arith.constant dense<0.000000e+00> : vector<16x128xf32>
    %60 = tpu.matmul %59, %0, %cst_14 {dimension_numbers = #tpu.dot_dimension_numbers<[1], [0], [0], [1], [0, 0, 1, 1], [], []>} : vector<16x128xbf16>, vector<128x128xbf16>, vector<16x128xf32> -> vector<16x128xf32>
    %c0_15 = arith.constant 0 : index
    %c0_16 = arith.constant 0 : index
    %61 = vector.load %arg6[%c0_15, %c0_16] : memref<8x16xbf16, #tpu.memory_space<vmem>>, vector<8x16xbf16>
    %62 = arith.truncf %60 : vector<16x128xf32> to vector<16x128xbf16>
    %cst_17 = arith.constant dense<0.000000e+00> : vector<8x128xf32>
    %63 = tpu.matmul %61, %62, %cst_17 {dimension_numbers = #tpu.dot_dimension_numbers<[1], [0], [0], [1], [0, 0, 1, 1], [], []>} : vector<8x16xbf16>, vector<16x128xbf16>, vector<8x128xf32> -> vector<8x128xf32>
    %64 = vector.broadcast %6 : vector<8x1xf32> to vector<8x128xf32>
    %65 = arith.addf %63, %64 : vector<8x128xf32>
    %cst_18 = arith.constant 0.000000e+00 : f32
    %66 = vector.broadcast %cst_18 : f32 to vector<8x128xf32>
    %67 = arith.maximumf %65, %66 : vector<8x128xf32>
    %c0_19 = arith.constant 0 : index
    %c0_20 = arith.constant 0 : index
    %68 = vector.load %arg7[%c0_19, %c0_20] : memref<16x8xbf16, #tpu.memory_space<vmem>>, vector<16x8xbf16>
    %69 = arith.truncf %67 : vector<8x128xf32> to vector<8x128xbf16>
    %cst_21 = arith.constant dense<0.000000e+00> : vector<16x128xf32>
    %70 = tpu.matmul %68, %69, %cst_21 {dimension_numbers = #tpu.dot_dimension_numbers<[1], [0], [0], [1], [0, 0, 1, 1], [], []>} : vector<16x8xbf16>, vector<8x128xbf16>, vector<16x128xf32> -> vector<16x128xf32>
    %71 = vector.broadcast %7 : vector<16x1xf32> to vector<16x128xf32>
    %72 = arith.addf %70, %71 : vector<16x128xf32>
    %73 = arith.negf %72 : vector<16x128xf32>
    %74 = math.exp %73 : vector<16x128xf32>
    %cst_22 = arith.constant 1.000000e+00 : f32
    %75 = vector.broadcast %cst_22 : f32 to vector<16x128xf32>
    %76 = arith.addf %75, %74 : vector<16x128xf32>
    %77 = arith.divf %75, %76 : vector<16x128xf32>
    %78 = arith.mulf %58, %77 : vector<16x128xf32>
    %c0_23 = arith.constant 0 : index
    %c0_24 = arith.constant 0 : index
    %79 = vector.load %arg5[%c0_23, %c0_24] : memref<32x16xbf16, #tpu.memory_space<vmem>>, vector<32x16xbf16>
    %80 = arith.truncf %78 : vector<16x128xf32> to vector<16x128xbf16>
    %cst_25 = arith.constant dense<0.000000e+00> : vector<32x128xf32>
    %81 = tpu.matmul %79, %80, %cst_25 {dimension_numbers = #tpu.dot_dimension_numbers<[1], [0], [0], [1], [0, 0, 1, 1], [], []>} : vector<32x16xbf16>, vector<16x128xbf16>, vector<32x128xf32> -> vector<32x128xf32>
    %82 = vector.broadcast %8 : vector<32x1xf32> to vector<32x128xf32>
    %83 = arith.addf %81, %82 : vector<32x128xf32>
    %cst_26 = arith.constant 0.000000e+00 : f32
    %84 = vector.broadcast %cst_26 : f32 to vector<32x128xf32>
    %85 = arith.maximumf %83, %84 : vector<32x128xf32>
    %c0_27 = arith.constant 0 : index
    %c0_28 = arith.constant 0 : index
    %86 = vector.load %arg8[%c0_27, %c0_28] : memref<32x16xbf16, #tpu.memory_space<vmem>>, vector<32x16xbf16>
    %cst_29 = arith.constant dense<0.000000e+00> : vector<32x128xf32>
    %87 = tpu.matmul %86, %51, %cst_29 {dimension_numbers = #tpu.dot_dimension_numbers<[1], [0], [0], [1], [0, 0, 1, 1], [], []>} : vector<32x16xbf16>, vector<16x128xbf16>, vector<32x128xf32> -> vector<32x128xf32>
    %88 = vector.broadcast %9 : vector<32x1xf32> to vector<32x128xf32>
    %89 = arith.addf %87, %88 : vector<32x128xf32>
    %90 = arith.addf %85, %89 : vector<32x128xf32>
    %cst_30 = arith.constant 0.000000e+00 : f32
    %91 = vector.broadcast %cst_30 : f32 to vector<32x128xf32>
    %92 = arith.maximumf %90, %91 : vector<32x128xf32>
    %c0_31 = arith.constant 0 : index
    %c0_32 = arith.constant 0 : index
    %93 = vector.load %arg16[%c0_31, %c0_32] : memref<32x5xf32, #tpu.memory_space<vmem>>, vector<32x5xf32>
    %c0_33 = arith.constant 0 : index
    %c0_34 = arith.constant 0 : index
    %94 = vector.load %arg17[%c0_33, %c0_34] : memref<9x128xbf16, #tpu.memory_space<vmem>>, vector<9x128xbf16>
    %95 = vector.extract_strided_slice %93 {offsets = [0, 0], sizes = [16, 1], strides = [1, 1]} : vector<32x5xf32> to vector<16x1xf32>
    %96 = vector.extract_strided_slice %93 {offsets = [0, 1], sizes = [16, 1], strides = [1, 1]} : vector<32x5xf32> to vector<16x1xf32>
    %97 = vector.extract_strided_slice %93 {offsets = [0, 2], sizes = [8, 1], strides = [1, 1]} : vector<32x5xf32> to vector<8x1xf32>
    %98 = vector.extract_strided_slice %93 {offsets = [0, 3], sizes = [16, 1], strides = [1, 1]} : vector<32x5xf32> to vector<16x1xf32>
    %99 = vector.extract_strided_slice %93 {offsets = [0, 4], sizes = [32, 1], strides = [1, 1]} : vector<32x5xf32> to vector<32x1xf32>
    %c0_35 = arith.constant 0 : index
    %c0_36 = arith.constant 0 : index
    %100 = vector.load %arg11[%c0_35, %c0_36] : memref<16x32xbf16, #tpu.memory_space<vmem>>, vector<16x32xbf16>
    %101 = arith.truncf %92 : vector<32x128xf32> to vector<32x128xbf16>
    %cst_37 = arith.constant dense<0.000000e+00> : vector<16x128xf32>
    %102 = tpu.matmul %100, %101, %cst_37 {dimension_numbers = #tpu.dot_dimension_numbers<[1], [0], [0], [1], [0, 0, 1, 1], [], []>} : vector<16x32xbf16>, vector<32x128xbf16>, vector<16x128xf32> -> vector<16x128xf32>
    %103 = vector.broadcast %95 : vector<16x1xf32> to vector<16x128xf32>
    %104 = arith.addf %102, %103 : vector<16x128xf32>
    %cst_38 = arith.constant 0.000000e+00 : f32
    %105 = vector.broadcast %cst_38 : f32 to vector<16x128xf32>
    %106 = arith.maximumf %104, %105 : vector<16x128xf32>
    %107 = arith.truncf %106 : vector<16x128xf32> to vector<16x128xbf16>
    %108 = vector.extract_strided_slice %107 {offsets = [0, 119], sizes = [16, 9], strides = [1, 1]} : vector<16x128xbf16> to vector<16x9xbf16>
    %109 = vector.extract_strided_slice %107 {offsets = [0, 0], sizes = [16, 119], strides = [1, 1]} : vector<16x128xbf16> to vector<16x119xbf16>
    %110 = tpu.concatenate %108, %109 in 1 : vector<16x9xbf16>, vector<16x119xbf16> -> vector<16x128xbf16>
    %111 = vector.extract_strided_slice %94 {offsets = [0, 0], sizes = [1, 128], strides = [1, 1]} : vector<9x128xbf16> to vector<1x128xbf16>
    %112 = vector.broadcast %111 : vector<1x128xbf16> to vector<16x128xbf16>
    %113 = arith.mulf %110, %112 : vector<16x128xbf16>
    %114 = vector.extract_strided_slice %107 {offsets = [0, 120], sizes = [16, 8], strides = [1, 1]} : vector<16x128xbf16> to vector<16x8xbf16>
    %115 = vector.extract_strided_slice %107 {offsets = [0, 0], sizes = [16, 120], strides = [1, 1]} : vector<16x128xbf16> to vector<16x120xbf16>
    %116 = tpu.concatenate %114, %115 in 1 : vector<16x8xbf16>, vector<16x120xbf16> -> vector<16x128xbf16>
    %117 = vector.extract_strided_slice %94 {offsets = [1, 0], sizes = [1, 128], strides = [1, 1]} : vector<9x128xbf16> to vector<1x128xbf16>
    %118 = vector.broadcast %117 : vector<1x128xbf16> to vector<16x128xbf16>
    %119 = arith.mulf %116, %118 : vector<16x128xbf16>
    %120 = vector.extract_strided_slice %107 {offsets = [0, 121], sizes = [16, 7], strides = [1, 1]} : vector<16x128xbf16> to vector<16x7xbf16>
    %121 = vector.extract_strided_slice %107 {offsets = [0, 0], sizes = [16, 121], strides = [1, 1]} : vector<16x128xbf16> to vector<16x121xbf16>
    %122 = tpu.concatenate %120, %121 in 1 : vector<16x7xbf16>, vector<16x121xbf16> -> vector<16x128xbf16>
    %123 = vector.extract_strided_slice %94 {offsets = [2, 0], sizes = [1, 128], strides = [1, 1]} : vector<9x128xbf16> to vector<1x128xbf16>
    %124 = vector.broadcast %123 : vector<1x128xbf16> to vector<16x128xbf16>
    %125 = arith.mulf %122, %124 : vector<16x128xbf16>
    %126 = vector.extract_strided_slice %107 {offsets = [0, 127], sizes = [16, 1], strides = [1, 1]} : vector<16x128xbf16> to vector<16x1xbf16>
    %127 = vector.extract_strided_slice %107 {offsets = [0, 0], sizes = [16, 127], strides = [1, 1]} : vector<16x128xbf16> to vector<16x127xbf16>
    %128 = tpu.concatenate %126, %127 in 1 : vector<16x1xbf16>, vector<16x127xbf16> -> vector<16x128xbf16>
    %129 = vector.extract_strided_slice %94 {offsets = [3, 0], sizes = [1, 128], strides = [1, 1]} : vector<9x128xbf16> to vector<1x128xbf16>
    %130 = vector.broadcast %129 : vector<1x128xbf16> to vector<16x128xbf16>
    %131 = arith.mulf %128, %130 : vector<16x128xbf16>
    %132 = vector.extract_strided_slice %107 {offsets = [0, 1], sizes = [16, 127], strides = [1, 1]} : vector<16x128xbf16> to vector<16x127xbf16>
    %133 = vector.extract_strided_slice %107 {offsets = [0, 0], sizes = [16, 1], strides = [1, 1]} : vector<16x128xbf16> to vector<16x1xbf16>
    %134 = tpu.concatenate %132, %133 in 1 : vector<16x127xbf16>, vector<16x1xbf16> -> vector<16x128xbf16>
    %135 = vector.extract_strided_slice %94 {offsets = [5, 0], sizes = [1, 128], strides = [1, 1]} : vector<9x128xbf16> to vector<1x128xbf16>
    %136 = vector.broadcast %135 : vector<1x128xbf16> to vector<16x128xbf16>
    %137 = arith.mulf %134, %136 : vector<16x128xbf16>
    %138 = vector.extract_strided_slice %107 {offsets = [0, 7], sizes = [16, 121], strides = [1, 1]} : vector<16x128xbf16> to vector<16x121xbf16>
    %139 = vector.extract_strided_slice %107 {offsets = [0, 0], sizes = [16, 7], strides = [1, 1]} : vector<16x128xbf16> to vector<16x7xbf16>
    %140 = tpu.concatenate %138, %139 in 1 : vector<16x121xbf16>, vector<16x7xbf16> -> vector<16x128xbf16>
    %141 = vector.extract_strided_slice %94 {offsets = [6, 0], sizes = [1, 128], strides = [1, 1]} : vector<9x128xbf16> to vector<1x128xbf16>
    %142 = vector.broadcast %141 : vector<1x128xbf16> to vector<16x128xbf16>
    %143 = arith.mulf %140, %142 : vector<16x128xbf16>
    %144 = vector.extract_strided_slice %107 {offsets = [0, 8], sizes = [16, 120], strides = [1, 1]} : vector<16x128xbf16> to vector<16x120xbf16>
    %145 = vector.extract_strided_slice %107 {offsets = [0, 0], sizes = [16, 8], strides = [1, 1]} : vector<16x128xbf16> to vector<16x8xbf16>
    %146 = tpu.concatenate %144, %145 in 1 : vector<16x120xbf16>, vector<16x8xbf16> -> vector<16x128xbf16>
    %147 = vector.extract_strided_slice %94 {offsets = [7, 0], sizes = [1, 128], strides = [1, 1]} : vector<9x128xbf16> to vector<1x128xbf16>
    %148 = vector.broadcast %147 : vector<1x128xbf16> to vector<16x128xbf16>
    %149 = arith.mulf %146, %148 : vector<16x128xbf16>
    %150 = vector.extract_strided_slice %107 {offsets = [0, 9], sizes = [16, 119], strides = [1, 1]} : vector<16x128xbf16> to vector<16x119xbf16>
    %151 = vector.extract_strided_slice %107 {offsets = [0, 0], sizes = [16, 9], strides = [1, 1]} : vector<16x128xbf16> to vector<16x9xbf16>
    %152 = tpu.concatenate %150, %151 in 1 : vector<16x119xbf16>, vector<16x9xbf16> -> vector<16x128xbf16>
    %153 = vector.extract_strided_slice %94 {offsets = [8, 0], sizes = [1, 128], strides = [1, 1]} : vector<9x128xbf16> to vector<1x128xbf16>
    %154 = vector.broadcast %153 : vector<1x128xbf16> to vector<16x128xbf16>
    %155 = arith.mulf %152, %154 : vector<16x128xbf16>
    %156 = tpu.concatenate %113, %119, %125, %131, %107, %137, %143, %149, %155 in 0 : vector<16x128xbf16>, vector<16x128xbf16>, vector<16x128xbf16>, vector<16x128xbf16>, vector<16x128xbf16>, vector<16x128xbf16>, vector<16x128xbf16>, vector<16x128xbf16>, vector<16x128xbf16> -> vector<144x128xbf16>
    %c0_39 = arith.constant 0 : index
    %c0_40 = arith.constant 0 : index
    %157 = vector.load %arg12[%c0_39, %c0_40] : memref<16x144xbf16, #tpu.memory_space<vmem>>, vector<16x144xbf16>
    %cst_41 = arith.constant dense<0.000000e+00> : vector<16x128xf32>
    %158 = tpu.matmul %157, %156, %cst_41 {dimension_numbers = #tpu.dot_dimension_numbers<[1], [0], [0], [1], [0, 0, 1, 1], [], []>} : vector<16x144xbf16>, vector<144x128xbf16>, vector<16x128xf32> -> vector<16x128xf32>
    %159 = vector.broadcast %96 : vector<16x1xf32> to vector<16x128xf32>
    %160 = arith.addf %158, %159 : vector<16x128xf32>
    %cst_42 = arith.constant 0.000000e+00 : f32
    %161 = vector.broadcast %cst_42 : f32 to vector<16x128xf32>
    %162 = arith.maximumf %160, %161 : vector<16x128xf32>
    %163 = arith.truncf %162 : vector<16x128xf32> to vector<16x128xbf16>
    %cst_43 = arith.constant dense<0.000000e+00> : vector<16x128xf32>
    %164 = tpu.matmul %163, %0, %cst_43 {dimension_numbers = #tpu.dot_dimension_numbers<[1], [0], [0], [1], [0, 0, 1, 1], [], []>} : vector<16x128xbf16>, vector<128x128xbf16>, vector<16x128xf32> -> vector<16x128xf32>
    %c0_44 = arith.constant 0 : index
    %c0_45 = arith.constant 0 : index
    %165 = vector.load %arg14[%c0_44, %c0_45] : memref<8x16xbf16, #tpu.memory_space<vmem>>, vector<8x16xbf16>
    %166 = arith.truncf %164 : vector<16x128xf32> to vector<16x128xbf16>
    %cst_46 = arith.constant dense<0.000000e+00> : vector<8x128xf32>
    %167 = tpu.matmul %165, %166, %cst_46 {dimension_numbers = #tpu.dot_dimension_numbers<[1], [0], [0], [1], [0, 0, 1, 1], [], []>} : vector<8x16xbf16>, vector<16x128xbf16>, vector<8x128xf32> -> vector<8x128xf32>
    %168 = vector.broadcast %97 : vector<8x1xf32> to vector<8x128xf32>
    %169 = arith.addf %167, %168 : vector<8x128xf32>
    %cst_47 = arith.constant 0.000000e+00 : f32
    %170 = vector.broadcast %cst_47 : f32 to vector<8x128xf32>
    %171 = arith.maximumf %169, %170 : vector<8x128xf32>
    %c0_48 = arith.constant 0 : index
    %c0_49 = arith.constant 0 : index
    %172 = vector.load %arg15[%c0_48, %c0_49] : memref<16x8xbf16, #tpu.memory_space<vmem>>, vector<16x8xbf16>
    %173 = arith.truncf %171 : vector<8x128xf32> to vector<8x128xbf16>
    %cst_50 = arith.constant dense<0.000000e+00> : vector<16x128xf32>
    %174 = tpu.matmul %172, %173, %cst_50 {dimension_numbers = #tpu.dot_dimension_numbers<[1], [0], [0], [1], [0, 0, 1, 1], [], []>} : vector<16x8xbf16>, vector<8x128xbf16>, vector<16x128xf32> -> vector<16x128xf32>
    %175 = vector.broadcast %98 : vector<16x1xf32> to vector<16x128xf32>
    %176 = arith.addf %174, %175 : vector<16x128xf32>
    %177 = arith.negf %176 : vector<16x128xf32>
    %178 = math.exp %177 : vector<16x128xf32>
    %cst_51 = arith.constant 1.000000e+00 : f32
    %179 = vector.broadcast %cst_51 : f32 to vector<16x128xf32>
    %180 = arith.addf %179, %178 : vector<16x128xf32>
    %181 = arith.divf %179, %180 : vector<16x128xf32>
    %182 = arith.mulf %162, %181 : vector<16x128xf32>
    %c0_52 = arith.constant 0 : index
    %c0_53 = arith.constant 0 : index
    %183 = vector.load %arg13[%c0_52, %c0_53] : memref<32x16xbf16, #tpu.memory_space<vmem>>, vector<32x16xbf16>
    %184 = arith.truncf %182 : vector<16x128xf32> to vector<16x128xbf16>
    %cst_54 = arith.constant dense<0.000000e+00> : vector<32x128xf32>
    %185 = tpu.matmul %183, %184, %cst_54 {dimension_numbers = #tpu.dot_dimension_numbers<[1], [0], [0], [1], [0, 0, 1, 1], [], []>} : vector<32x16xbf16>, vector<16x128xbf16>, vector<32x128xf32> -> vector<32x128xf32>
    %186 = vector.broadcast %99 : vector<32x1xf32> to vector<32x128xf32>
    %187 = arith.addf %185, %186 : vector<32x128xf32>
    %cst_55 = arith.constant 0.000000e+00 : f32
    %188 = vector.broadcast %cst_55 : f32 to vector<32x128xf32>
    %189 = arith.maximumf %187, %188 : vector<32x128xf32>
    %190 = arith.addf %189, %92 : vector<32x128xf32>
    %cst_56 = arith.constant 0.000000e+00 : f32
    %191 = vector.broadcast %cst_56 : f32 to vector<32x128xf32>
    %192 = arith.maximumf %190, %191 : vector<32x128xf32>
    %c0_57 = arith.constant 0 : index
    %c0_58 = arith.constant 0 : index
    %193 = vector.load %arg18[%c0_57, %c0_58] : memref<32x128xf32, #tpu.memory_space<vmem>>, vector<32x128xf32>
    tpu.vector_store %arg18[%c0_57, %c0_58], %192 {strides = array<i32>} : memref<32x128xf32, #tpu.memory_space<vmem>>, vector<32x128xf32>,
    return
  }
  func.func @transform_0(%arg0: i32) -> (i32, i32) {
    %c0_i32 = arith.constant 0 : i32
    %c0_i32_0 = arith.constant 0 : i32
    %c0_i32_1 = arith.constant 0 : i32
    return %c0_i32, %c0_i32_0 : i32, i32
  }
  func.func @transform_1(%arg0: i32) -> (i32, i32) {
    %c0_i32 = arith.constant 0 : i32
    %c0_i32_0 = arith.constant 0 : i32
    %c0_i32_1 = arith.constant 0 : i32
    return %c0_i32, %c0_i32_0 : i32, i32
  }
  func.func @transform_2(%arg0: i32) -> (i32, i32) {
    %c0_i32 = arith.constant 0 : i32
    %c0_i32_0 = arith.constant 0 : i32
    %c0_i32_1 = arith.constant 0 : i32
    return %c0_i32, %c0_i32_0 : i32, i32
  }
  func.func @transform_3(%arg0: i32) -> (i32, i32) {
    %c0_i32 = arith.constant 0 : i32
    %c0_i32_0 = arith.constant 0 : i32
    %c0_i32_1 = arith.constant 0 : i32
    return %c0_i32, %c0_i32_0 : i32, i32
  }
  func.func @transform_4(%arg0: i32) -> (i32, i32) {
    %c0_i32 = arith.constant 0 : i32
    %c0_i32_0 = arith.constant 0 : i32
    %c0_i32_1 = arith.constant 0 : i32
    return %c0_i32, %c0_i32_0 : i32, i32
  }
  func.func @transform_5(%arg0: i32) -> (i32, i32) {
    %c0_i32 = arith.constant 0 : i32
    %c0_i32_0 = arith.constant 0 : i32
    %c0_i32_1 = arith.constant 0 : i32
    return %c0_i32, %c0_i32_0 : i32, i32
  }
  func.func @transform_6(%arg0: i32) -> (i32, i32) {
    %c0_i32 = arith.constant 0 : i32
    %c0_i32_0 = arith.constant 0 : i32
    %c0_i32_1 = arith.constant 0 : i32
    return %c0_i32, %c0_i32_0 : i32, i32
  }
  func.func @transform_7(%arg0: i32) -> (i32, i32) {
    %c0_i32 = arith.constant 0 : i32
    %c0_i32_0 = arith.constant 0 : i32
    %c0_i32_1 = arith.constant 0 : i32
    return %c0_i32, %c0_i32_0 : i32, i32
  }
  func.func @transform_8(%arg0: i32) -> (i32, i32) {
    %c0_i32 = arith.constant 0 : i32
    %c0_i32_0 = arith.constant 0 : i32
    %c0_i32_1 = arith.constant 0 : i32
    return %c0_i32, %c0_i32_0 : i32, i32
  }
  func.func @transform_9(%arg0: i32) -> (i32, i32) {
    %c0_i32 = arith.constant 0 : i32
    %c0_i32_0 = arith.constant 0 : i32
    %c0_i32_1 = arith.constant 0 : i32
    return %c0_i32, %c0_i32_0 : i32, i32
  }
  func.func @transform_10(%arg0: i32) -> (i32, i32) {
    %c0_i32 = arith.constant 0 : i32
    %c0_i32_0 = arith.constant 0 : i32
    %c0_i32_1 = arith.constant 0 : i32
    return %c0_i32, %c0_i32_0 : i32, i32
  }
  func.func @transform_11(%arg0: i32) -> (i32, i32) {
    %c0_i32 = arith.constant 0 : i32
    %c0_i32_0 = arith.constant 0 : i32
    %c0_i32_1 = arith.constant 0 : i32
    return %c0_i32, %c0_i32_0 : i32, i32
  }
  func.func @transform_12(%arg0: i32) -> (i32, i32) {
    %c0_i32 = arith.constant 0 : i32
    %c0_i32_0 = arith.constant 0 : i32
    %c0_i32_1 = arith.constant 0 : i32
    return %c0_i32, %c0_i32_0 : i32, i32
  }
  func.func @transform_13(%arg0: i32) -> (i32, i32) {
    %c0_i32 = arith.constant 0 : i32
    %c0_i32_0 = arith.constant 0 : i32
    %c0_i32_1 = arith.constant 0 : i32
    return %c0_i32, %c0_i32_0 : i32, i32
  }
  func.func @transform_14(%arg0: i32) -> (i32, i32) {
    %c0_i32 = arith.constant 0 : i32
    %c0_i32_0 = arith.constant 0 : i32
    %c0_i32_1 = arith.constant 0 : i32
    return %c0_i32, %c0_i32_0 : i32, i32
  }
  func.func @transform_15(%arg0: i32) -> (i32, i32) {
    %c0_i32 = arith.constant 0 : i32
    %c0_i32_0 = arith.constant 0 : i32
    %c0_i32_1 = arith.constant 0 : i32
    return %c0_i32, %c0_i32_0 : i32, i32
  }
  func.func @transform_16(%arg0: i32) -> (i32, i32) {
    %c0_i32 = arith.constant 0 : i32
    %c0_i32_0 = arith.constant 0 : i32
    %c0_i32_1 = arith.constant 0 : i32
    return %c0_i32, %c0_i32_0 : i32, i32
  }
  func.func @transform_17(%arg0: i32) -> (i32, i32) {
    %c0_i32 = arith.constant 0 : i32
    %c0_i32_0 = arith.constant 0 : i32
    %c0_i32_1 = arith.constant 0 : i32
    return %c0_i32, %c0_i32_0 : i32, i32
  }
}

</mosaic_0001>

<llo_original>
// kernel: stage_forward.1
$region0: #{stage_forward.1}
  #allocation0 [shape = 'u32[]', space=smem, size = 0x4, offset = 0x4, fixed_abs, tag = 'smem constant byte address 0x4 - core index']
  #allocation1 [shape = 'u32[72,128]{1,0:T(1,128)}', space=vmem, size = 0x9000, scoped, tag = 'internal scratch']
  %s0 = inlined_call_operand.vmem [shape: bf16[16,512], index: 0, kind: input, shape index: {}]
  %s1 = inlined_call_operand.vmem [shape: bf16[128,128], index: 1, kind: input, shape index: {}]
  %s2 = inlined_call_operand.vmem [shape: bf16[16,16], index: 2, kind: input, shape index: {}]
  %s3 = inlined_call_operand.vmem [shape: bf16[16,144], index: 3, kind: input, shape index: {}]
  %s4 = inlined_call_operand.vmem [shape: bf16[32,16], index: 4, kind: input, shape index: {}]
  %s5 = inlined_call_operand.vmem [shape: bf16[8,16], index: 5, kind: input, shape index: {}]
  %s6 = inlined_call_operand.vmem [shape: bf16[16,8], index: 6, kind: input, shape index: {}]
  %s7 = inlined_call_operand.vmem [shape: bf16[32,16], index: 7, kind: input, shape index: {}]
  %s8 = inlined_call_operand.vmem [shape: f32[32,6], index: 8, kind: input, shape index: {}]
  %s9 = inlined_call_operand.vmem [shape: bf16[9,128], index: 9, kind: input, shape index: {}]
  %s10 = inlined_call_operand.vmem [shape: bf16[16,32], index: 10, kind: input, shape index: {}]
  %s11 = inlined_call_operand.vmem [shape: bf16[16,144], index: 11, kind: input, shape index: {}]
  %s12 = inlined_call_operand.vmem [shape: bf16[32,16], index: 12, kind: input, shape index: {}]
  %s13 = inlined_call_operand.vmem [shape: bf16[8,16], index: 13, kind: input, shape index: {}]
  %s14 = inlined_call_operand.vmem [shape: bf16[16,8], index: 14, kind: input, shape index: {}]
  %s15 = inlined_call_operand.vmem [shape: f32[32,5], index: 15, kind: input, shape index: {}]
  %s16 = inlined_call_operand.vmem [shape: bf16[9,128], index: 16, kind: input, shape index: {}]
  %s17 = inlined_call_operand.vmem [shape: f32[32,128], index: 17, kind: output, shape index: {}]
  %s18 = sld [smem:[#allocation0]]
  $region78: #{stage_forward.1} parent=0
    _
  %s20 = ssub.s32 1, %s18
  %s21 = scalar_select 0, %s20, %s18
  // Predicated region
  $region2: #{stage_forward.1} parent=0 // pred_check
    _
  $region3: #{stage_forward.1} parent=0 // pred_check_branch
    %23 = sbr.rel (0) target = $region5
  $region4: #{stage_forward.1} parent=0 // pred_region
    _
  $region5: #{stage_forward.1} parent=0 // pred_fallthru
    _
  // Predicated region
  $region6: #{stage_forward.1} parent=0 // pred_check
    _
  $region7: #{stage_forward.1} parent=0 // pred_check_branch
    %25 = sbr.rel (0) target = $region9
  $region8: #{stage_forward.1} parent=0 // pred_region
    _
  $region9: #{stage_forward.1} parent=0 // pred_fallthru
    _
  // Predicated region
  $region10: #{stage_forward.1} parent=0 // pred_check
    _
  $region11: #{stage_forward.1} parent=0 // pred_check_branch
    %27 = sbr.rel (0) target = $region13
  $region12: #{stage_forward.1} parent=0 // pred_region
    _
  $region13: #{stage_forward.1} parent=0 // pred_fallthru
    _
  // Predicated region
  $region14: #{stage_forward.1} parent=0 // pred_check
    _
  $region15: #{stage_forward.1} parent=0 // pred_check_branch
    %29 = sbr.rel (0) target = $region17
  $region16: #{stage_forward.1} parent=0 // pred_region
    _
  $region17: #{stage_forward.1} parent=0 // pred_fallthru
    _
  // Predicated region
  $region18: #{stage_forward.1} parent=0 // pred_check
    _
  $region19: #{stage_forward.1} parent=0 // pred_check_branch
    %31 = sbr.rel (0) target = $region21
  $region20: #{stage_forward.1} parent=0 // pred_region
    _
  $region21: #{stage_forward.1} parent=0 // pred_fallthru
    _
  // Predicated region
  $region22: #{stage_forward.1} parent=0 // pred_check
    _
  $region23: #{stage_forward.1} parent=0 // pred_check_branch
    %33 = sbr.rel (0) target = $region25
  $region24: #{stage_forward.1} parent=0 // pred_region
    _
  $region25: #{stage_forward.1} parent=0 // pred_fallthru
    _
  // Predicated region
  $region26: #{stage_forward.1} parent=0 // pred_check
    _
  $region27: #{stage_forward.1} parent=0 // pred_check_branch
    %35 = sbr.rel (0) target = $region29
  $region28: #{stage_forward.1} parent=0 // pred_region
    _
  $region29: #{stage_forward.1} parent=0 // pred_fallthru
    _
  // Predicated region
  $region30: #{stage_forward.1} parent=0 // pred_check
    _
  $region31: #{stage_forward.1} parent=0 // pred_check_branch
    %37 = sbr.rel (0) target = $region33
  $region32: #{stage_forward.1} parent=0 // pred_region
    _
  $region33: #{stage_forward.1} parent=0 // pred_fallthru
    _
  // Predicated region
  $region34: #{stage_forward.1} parent=0 // pred_check
    _
  $region35: #{stage_forward.1} parent=0 // pred_check_branch
    %39 = sbr.rel (0) target = $region37
  $region36: #{stage_forward.1} parent=0 // pred_region
    _
  $region37: #{stage_forward.1} parent=0 // pred_fallthru
    _
  // Predicated region
  $region38: #{stage_forward.1} parent=0 // pred_check
    _
  $region39: #{stage_forward.1} parent=0 // pred_check_branch
    %41 = sbr.rel (0) target = $region41
  $region40: #{stage_forward.1} parent=0 // pred_region
    _
  $region41: #{stage_forward.1} parent=0 // pred_fallthru
    _
  // Predicated region
  $region42: #{stage_forward.1} parent=0 // pred_check
    _
  $region43: #{stage_forward.1} parent=0 // pred_check_branch
    %43 = sbr.rel (0) target = $region45
  $region44: #{stage_forward.1} parent=0 // pred_region
    _
  $region45: #{stage_forward.1} parent=0 // pred_fallthru
    _
  // Predicated region
  $region46: #{stage_forward.1} parent=0 // pred_check
    _
  $region47: #{stage_forward.1} parent=0 // pred_check_branch
    %45 = sbr.rel (0) target = $region49
  $region48: #{stage_forward.1} parent=0 // pred_region
    _
  $region49: #{stage_forward.1} parent=0 // pred_fallthru
    _
  // Predicated region
  $region50: #{stage_forward.1} parent=0 // pred_check
    _
  $region51: #{stage_forward.1} parent=0 // pred_check_branch
    %47 = sbr.rel (0) target = $region53
  $region52: #{stage_forward.1} parent=0 // pred_region
    _
  $region53: #{stage_forward.1} parent=0 // pred_fallthru
    _
  // Predicated region
  $region54: #{stage_forward.1} parent=0 // pred_check
    _
  $region55: #{stage_forward.1} parent=0 // pred_check_branch
    %49 = sbr.rel (0) target = $region57
  $region56: #{stage_forward.1} parent=0 // pred_region
    _
  $region57: #{stage_forward.1} parent=0 // pred_fallthru
    _
  // Predicated region
  $region58: #{stage_forward.1} parent=0 // pred_check
    _
  $region59: #{stage_forward.1} parent=0 // pred_check_branch
    %51 = sbr.rel (0) target = $region61
  $region60: #{stage_forward.1} parent=0 // pred_region
    _
  $region61: #{stage_forward.1} parent=0 // pred_fallthru
    _
  // Predicated region
  $region62: #{stage_forward.1} parent=0 // pred_check
    _
  $region63: #{stage_forward.1} parent=0 // pred_check_branch
    %53 = sbr.rel (0) target = $region65
  $region64: #{stage_forward.1} parent=0 // pred_region
    _
  $region65: #{stage_forward.1} parent=0 // pred_fallthru
    _
  // Predicated region
  $region66: #{stage_forward.1} parent=0 // pred_check
    _
  $region67: #{stage_forward.1} parent=0 // pred_check_branch
    %55 = sbr.rel (0) target = $region69
  $region68: #{stage_forward.1} parent=0 // pred_region
    _
  $region69: #{stage_forward.1} parent=0 // pred_fallthru
    _
  %v57 = vld [vmem:[%s1] sm:$0xf]
  %v58 = vld [vmem:[%s1 + $0x4] sm:$0xf]
  %v59 = vld [vmem:[%s1 + $0x8] sm:$0xf]
  %v60 = vld [vmem:[%s1 + $0xc] sm:$0xf]
  %v61 = vld [vmem:[%s1 + $0x10] sm:$0xf]
  %v62 = vld [vmem:[%s1 + $0x14] sm:$0xf]
  %v63 = vld [vmem:[%s1 + $0x18] sm:$0xf]
  %v64 = vld [vmem:[%s1 + $0x1c] sm:$0xf]
  %v65 = vld [vmem:[%s1 + $0x20] sm:$0xf]
  %v66 = vld [vmem:[%s1 + $0x24] sm:$0xf]
  %v67 = vld [vmem:[%s1 + $0x28] sm:$0xf]
  %v68 = vld [vmem:[%s1 + $0x2c] sm:$0xf]
  %v69 = vld [vmem:[%s1 + $0x30] sm:$0xf]
  %v70 = vld [vmem:[%s1 + $0x34] sm:$0xf]
  %v71 = vld [vmem:[%s1 + $0x38] sm:$0xf]
  %v72 = vld [vmem:[%s1 + $0x3c] sm:$0xf]
  %v73 = vld [vmem:[%s0] sm:$0xff]
  %v74 = vld [vmem:[%s0 + $0x8] sm:$0xff]
  %v75 = vld [vmem:[%s0 + $0x10] sm:$0xff]
  %v76 = vld [vmem:[%s0 + $0x18] sm:$0xff]
  %v77 = vld [vmem:[%s8] sm:$0xff]
  %v78 = vld [vmem:[%s8 + $0x8] sm:$0xff]
  %v79 = vld [vmem:[%s8 + $0x10] sm:$0xff]
  %v80 = vld [vmem:[%s8 + $0x18] sm:$0xff]
  %v81 = vld [vmem:[%s9] sm:$0xf]
  %v82 = vld [vmem:[%s2] sm:$0xf]
  %v83 = vld [vmem:[%s2 + $0x4] sm:$0xf]
  %85 = vset.pattern.permute.xlu0 0
  %86 = vperm.xlu0 %85, %v77
  %v87 = vpop.permute.xlu0 %86
  %90 = vset.pattern.permute.xlu0 0
  %91 = vperm.xlu0 %90, %v78
  %v92 = vpop.permute.xlu0 %91
  %v96 = vunpack.c.l.b16 %v82
  %v97 = vunpack.c.l.b16 %v83
  %v98 = vpack.c.b16 %v97, %v96
  %v103 = vunpack.c.l.b16 %v73
  %v104 = vunpack.c.h.b16 %v73
  %v105 = vunpack.c.l.b16 %v74
  %v106 = vunpack.c.h.b16 %v74
  %v107 = vunpack.c.l.b16 %v75
  %v108 = vunpack.c.h.b16 %v75
  %v109 = vunpack.c.l.b16 %v76
  %v110 = vunpack.c.h.b16 %v76
  %v111 = vpack.c.b16 %v107, %v103
  %v112 = vpack.c.b16 %v108, %v104
  %v113 = vpack.c.b16 %v109, %v105
  %v114 = vpack.c.b16 %v110, %v106
  %vm119 = vcmask 130048
  %v121 = vsel %vm119, %v98, 0
  %123 = vmatpush.bf16.msra.mxu0 0
  %124 = vmatpush.bf16.msra.mxu0 0
  %125 = vmatpush.bf16.msra.mxu0 0
  %126 = vmatpush.bf16.msra.mxu0 0
  %127 = vmatpush.bf16.msra.mxu0 0
  %128 = vmatpush.bf16.msra.mxu0 0
  %129 = vmatpush.bf16.msra.mxu0 0
  %130 = vmatpush.bf16.msra.mxu0 %v111
  %131 = vmatmul.bf16.gmra.mxu0 %v121
  %v132 = vpop.f32.mrf.mxu0
  %v133 = vadd.f32 %v87, %v132
  %v134 = vpop.f32.mrf.mxu0
  %v135 = vadd.f32 %v92, %v134
  %136 = vdwg.mxu0
  %137 = vmatpush.bf16.msra.mxu0 0
  %138 = vmatpush.bf16.msra.mxu0 0
  %139 = vmatpush.bf16.msra.mxu0 0
  %140 = vmatpush.bf16.msra.mxu0 0
  %141 = vmatpush.bf16.msra.mxu0 0
  %142 = vmatpush.bf16.msra.mxu0 0
  %143 = vmatpush.bf16.msra.mxu0 0
  %144 = vmatpush.bf16.msra.mxu0 %v112
  %145 = vmatmul.bf16.gmra.mxu0 %v121
  %v146 = vpop.f32.mrf.mxu0
  %v147 = vadd.f32 %v87, %v146
  %v148 = vpop.f32.mrf.mxu0
  %v149 = vadd.f32 %v92, %v148
  %150 = vdwg.mxu0
  %151 = vmatpush.bf16.msra.mxu0 0
  %152 = vmatpush.bf16.msra.mxu0 0
  %153 = vmatpush.bf16.msra.mxu0 0
  %154 = vmatpush.bf16.msra.mxu0 0
  %155 = vmatpush.bf16.msra.mxu0 0
  %156 = vmatpush.bf16.msra.mxu0 0
  %157 = vmatpush.bf16.msra.mxu0 0
  %158 = vmatpush.bf16.msra.mxu0 %v113
  %159 = vmatmul.bf16.gmra.mxu0 %v121
  %v160 = vpop.f32.mrf.mxu0
  %v161 = vadd.f32 %v87, %v160
  %v162 = vpop.f32.mrf.mxu0
  %v163 = vadd.f32 %v92, %v162
  %164 = vdwg.mxu0
  %165 = vmatpush.bf16.msra.mxu0 0
  %166 = vmatpush.bf16.msra.mxu0 0
  %167 = vmatpush.bf16.msra.mxu0 0
  %168 = vmatpush.bf16.msra.mxu0 0
  %169 = vmatpush.bf16.msra.mxu0 0
  %170 = vmatpush.bf16.msra.mxu0 0
  %171 = vmatpush.bf16.msra.mxu0 0
  %172 = vmatpush.bf16.msra.mxu0 %v114
  %173 = vmatmul.bf16.gmra.mxu0 %v121
  %v174 = vpop.f32.mrf.mxu0
  %v175 = vadd.f32 %v87, %v174
  %v176 = vpop.f32.mrf.mxu0
  %v177 = vadd.f32 %v92, %v176
  %178 = vdwg.mxu0
  %v179 = vmax.f32 %v133, 0.0
  %v180 = vmax.f32 %v147, 0.0
  %v181 = vmax.f32 %v161, 0.0
  %v182 = vmax.f32 %v175, 0.0
  %v183 = vmax.f32 %v135, 0.0
  %v184 = vmax.f32 %v149, 0.0
  %v185 = vmax.f32 %v163, 0.0
  %v186 = vmax.f32 %v177, 0.0
  %v187 = vpack.c.bf16 %v180, %v179
  %v188 = vpack.c.bf16 %v182, %v181
  %v189 = vpack.c.bf16 %v184, %v183
  %v190 = vpack.c.bf16 %v186, %v185
  %v193 = vunpack.c.h.b16 %v188
  %v194 = vunpack.c.h.b16 %v190
  %v195 = vpack.c.b16 %v194, %v193
  %196 = vrot.lane.b32.xlu0 %v195, 9
  %v197 = vpop.permute.xlu0 %196
  %v201 = vpack.i.b16 %v81, %v81
  %v203 = vperm.slane %v201, 0
  %v204 = vunpack.c.l.bf16 %v197
  %v205 = vunpack.c.h.bf16 %v197
  %v206 = vunpack.c.l.bf16 %v203
  %v207 = vmul.f32 %v204, %v206
  %v208 = vmul.f32 %v205, %v206
  %v209 = vpack.c.bf16 %v207, %v207
  %v210 = vpack.c.bf16 %v208, %v208
  %v211 = vunpack.c.l.b16 %v188
  %v212 = vunpack.c.l.b16 %v190
  %v213 = vpack.c.b16 %v212, %v211
  %214 = vrot.lane.b32.xlu0 %v213, 8
  %v215 = vpop.permute.xlu0 %214
  %vm216 = vcmask 64512
  %v219 = vshrl.u32 %v81, 16
  %v220 = vpack.i.b16 %v219, %v219
  %v222 = vperm.slane %v220, 0
  %v223 = vunpack.c.l.bf16 %v215
  %v224 = vunpack.c.h.bf16 %v215
  %v225 = vunpack.c.l.bf16 %v222
  %v226 = vmul.f32 %v223, %v225
  %v227 = vmul.f32 %v224, %v225
  %v228 = vpack.c.bf16 %v226, %v226
  %v229 = vpack.c.bf16 %v227, %v227
  %230 = vrot.lane.b32.xlu0 %v195, 8
  %v231 = vpop.permute.xlu0 %230
  %v234 = vperm.slane %v201, 1
  %v235 = vunpack.c.l.bf16 %v231
  %v236 = vunpack.c.h.bf16 %v231
  %v237 = vunpack.c.l.bf16 %v234
  %v238 = vmul.f32 %v235, %v237
  %v239 = vmul.f32 %v236, %v237
  %v240 = vpack.c.bf16 %v238, %v238
  %v241 = vpack.c.bf16 %v239, %v239
  %v244 = vunpack.c.h.b16 %v187
  %v245 = vunpack.c.h.b16 %v189
  %v246 = vpack.c.b16 %v245, %v244
  %247 = vrot.lane.b32.xlu0 %v246, 1
  %v248 = vpop.permute.xlu0 %247
  %v251 = vperm.slane %v220, 1
  %v252 = vunpack.c.l.bf16 %v248
  %v253 = vunpack.c.h.bf16 %v248
  %v254 = vunpack.c.l.bf16 %v251
  %v255 = vmul.f32 %v252, %v254
  %v256 = vmul.f32 %v253, %v254
  %v257 = vpack.c.bf16 %v255, %v255
  %v258 = vpack.c.bf16 %v256, %v256
  %259 = vrot.lane.b32.xlu0 %v195, 1
  %v260 = vpop.permute.xlu0 %259
  %v263 = vperm.slane %v201, 3
  %v264 = vunpack.c.l.bf16 %v260
  %v265 = vunpack.c.h.bf16 %v260
  %v266 = vunpack.c.l.bf16 %v263
  %v267 = vmul.f32 %v264, %v266
  %v268 = vmul.f32 %v265, %v266
  %v269 = vpack.c.bf16 %v267, %v267
  %v270 = vpack.c.bf16 %v268, %v268
  %v273 = vunpack.c.l.b16 %v209
  %v274 = vunpack.c.l.b16 %v210
  %v275 = vpack.c.b16 %v274, %v273
  %v279 = vunpack.c.l.b16 %v228
  %v280 = vunpack.c.l.b16 %v229
  %v281 = vpack.c.b16 %v280, %v279
  %v285 = vunpack.c.l.b16 %v240
  %v286 = vunpack.c.l.b16 %v241
  %v287 = vpack.c.b16 %v286, %v285
  %v291 = vunpack.c.l.b16 %v257
  %v292 = vunpack.c.l.b16 %v258
  %v293 = vpack.c.b16 %v292, %v291
  %v295 = vunpack.c.l.b16 %v187
  %v296 = vunpack.c.l.b16 %v189
  %v297 = vpack.c.b16 %v296, %v295
  %v302 = vunpack.c.l.b16 %v269
  %v303 = vunpack.c.l.b16 %v270
  %v304 = vpack.c.b16 %v303, %v302
  %v308 = vld [vmem:[%s3] sm:$0xff]
  %v309 = vld [vmem:[%s3 + $0x8] sm:$0xff]
  %310 = vset.pattern.permute.xlu0 1
  %311 = vperm.xlu0 %310, %v77
  %v312 = vpop.permute.xlu0 %311
  %314 = vset.pattern.permute.xlu0 1
  %315 = vperm.xlu0 %314, %v78
  %v316 = vpop.permute.xlu0 %315
  %v320 = vunpack.c.l.b16 %v308
  %v321 = vunpack.c.h.b16 %v308
  %v322 = vunpack.c.l.b16 %v309
  %v323 = vunpack.c.h.b16 %v309
  %v324 = vpack.c.b16 %v322, %v320
  %v325 = vpack.c.b16 %v323, %v321
  %v328 = vsel %vm119, %v325, 0
  %330 = vmatpush.bf16.msra.mxu0 %v213
  %331 = vmatpush.bf16.msra.mxu0 %v304
  %332 = vmatpush.bf16.msra.mxu0 %v246
  %333 = vmatpush.bf16.msra.mxu0 %v297
  %334 = vmatpush.bf16.msra.mxu0 %v293
  %335 = vmatpush.bf16.msra.mxu0 %v287
  %336 = vmatpush.bf16.msra.mxu0 %v281
  %337 = vmatpush.bf16.msra.mxu0 %v275
  %338 = vmatmul.bf16.gmra.mxu0 %v324
  %v339 = vpop.f32.mrf.mxu0
  %v340 = vadd.f32 %v312, %v339
  %v341 = vpop.f32.mrf.mxu0
  %v342 = vadd.f32 %v316, %v341
  %343 = vdwg.mxu0
  %344 = vmatpush.bf16.msra.mxu0 0
  %345 = vmatpush.bf16.msra.mxu0 0
  %346 = vmatpush.bf16.msra.mxu0 0
  %347 = vmatpush.bf16.msra.mxu0 0
  %348 = vmatpush.bf16.msra.mxu0 0
  %349 = vmatpush.bf16.msra.mxu0 0
  %350 = vmatpush.bf16.msra.mxu0 0
  %351 = vmatpush.bf16.msra.mxu0 %v195
  %352 = vmatmul.bf16.gmra.mxu0 %v328
  %v353 = vpop.f32.mrf.mxu0
  %v354 = vadd.f32 %v340, %v353
  %v355 = vpop.f32.mrf.mxu0
  %v356 = vadd.f32 %v342, %v355
  %357 = vdwg.mxu0
  %v358 = vmax.f32 %v354, 0.0
  %v359 = vmax.f32 %v356, 0.0
  %v360 = vpack.c.bf16 %v359, %v358
  %v377 = vunpack.c.l.b16 %v57
  %v378 = vunpack.c.l.b16 %v58
  %v379 = vunpack.c.l.b16 %v59
  %v380 = vunpack.c.l.b16 %v60
  %v381 = vunpack.c.l.b16 %v61
  %v382 = vunpack.c.l.b16 %v62
  %v383 = vunpack.c.l.b16 %v63
  %v384 = vunpack.c.l.b16 %v64
  %v385 = vunpack.c.l.b16 %v65
  %v386 = vunpack.c.l.b16 %v66
  %v387 = vunpack.c.l.b16 %v67
  %v388 = vunpack.c.l.b16 %v68
  %v389 = vunpack.c.l.b16 %v69
  %v390 = vunpack.c.l.b16 %v70
  %v391 = vunpack.c.l.b16 %v71
  %v392 = vunpack.c.l.b16 %v72
  %v393 = vpack.c.b16 %v378, %v377
  %v394 = vpack.c.b16 %v380, %v379
  %v395 = vpack.c.b16 %v382, %v381
  %v396 = vpack.c.b16 %v384, %v383
  %v397 = vpack.c.b16 %v386, %v385
  %v398 = vpack.c.b16 %v388, %v387
  %v399 = vpack.c.b16 %v390, %v389
  %v400 = vpack.c.b16 %v392, %v391
  %409 = vmatpush.bf16.msra.mxu0 %v400
  %410 = vmatpush.bf16.msra.mxu0 %v399
  %411 = vmatpush.bf16.msra.mxu0 %v398
  %412 = vmatpush.bf16.msra.mxu0 %v397
  %413 = vmatpush.bf16.msra.mxu0 %v396
  %414 = vmatpush.bf16.msra.mxu0 %v395
  %415 = vmatpush.bf16.msra.mxu0 %v394
  %416 = vmatpush.bf16.msra.mxu0 %v393
  %417 = vmatmul.bf16.gmra.mxu0 %v360
  %v418 = vpop.f32.mrf.mxu0
  %v419 = vadd.f32 0.0, %v418
  %v420 = vpop.f32.mrf.mxu0
  %v421 = vadd.f32 0.0, %v420
  %422 = vdwg.mxu0
  %v423 = vld [vmem:[%s5] sm:$0xf]
  %v424 = vpack.c.bf16 %v421, %v419
  %425 = vset.pattern.permute.xlu0 2
  %426 = vperm.xlu0 %425, %v77
  %v427 = vpop.permute.xlu0 %426
  %v430 = vsel %vm119, %v423, 0
  %432 = vmatpush.bf16.msra.mxu0 0
  %433 = vmatpush.bf16.msra.mxu0 0
  %434 = vmatpush.bf16.msra.mxu0 0
  %435 = vmatpush.bf16.msra.mxu0 0
  %436 = vmatpush.bf16.msra.mxu0 0
  %437 = vmatpush.bf16.msra.mxu0 0
  %438 = vmatpush.bf16.msra.mxu0 0
  %439 = vmatpush.bf16.msra.mxu0 %v424
  %440 = vmatmul.bf16.gmra.mxu0 %v430
  %v441 = vpop.f32.mrf.mxu0
  %v442 = vadd.f32 %v427, %v441
  %v443 = vpop.f32.mrf.mxu0
  %444 = vdwg.mxu0
  %v445 = vmax.f32 %v442, 0.0
  %v446 = vld [vmem:[%s6] sm:$0xf]
  %v447 = vld [vmem:[%s6 + $0x4] sm:$0xf]
  %v448 = vpack.c.bf16 %v445, %v445
  %449 = vset.pattern.permute.xlu0 3
  %450 = vperm.xlu0 %449, %v77
  %v451 = vpop.permute.xlu0 %450
  %453 = vset.pattern.permute.xlu0 3
  %454 = vperm.xlu0 %453, %v78
  %v455 = vpop.permute.xlu0 %454
  %v459 = vunpack.c.l.b16 %v446
  %v460 = vunpack.c.l.b16 %v447
  %v461 = vpack.c.b16 %v460, %v459
  %v463 = vsel %vm216, %v461, 0
  %vm465 = vcmask 1043456
  %v467 = vsel %vm465, %v448, 0
  %469 = vmatpush.bf16.msra.mxu0 0
  %470 = vmatpush.bf16.msra.mxu0 0
  %471 = vmatpush.bf16.msra.mxu0 0
  %472 = vmatpush.bf16.msra.mxu0 0
  %473 = vmatpush.bf16.msra.mxu0 0
  %474 = vmatpush.bf16.msra.mxu0 0
  %475 = vmatpush.bf16.msra.mxu0 0
  %476 = vmatpush.bf16.msra.mxu0 %v467
  %477 = vmatmul.bf16.gmra.mxu0 %v463
  %v478 = vpop.f32.mrf.mxu0
  %v479 = vadd.f32 %v451, %v478
  %v480 = vpop.f32.mrf.mxu0
  %v481 = vadd.f32 %v455, %v480
  %482 = vdwg.mxu0
  %v483 = vxor.u32 %v479, 2147483648
  %v484 = vxor.u32 %v481, 2147483648
  %v485 = vmul.f32 %v483, 1.442695
  %v486 = vpow.pop %v485
  %v487 = vmul.f32 %v484, 1.442695
  %v488 = vpow.pop %v487
  %v489 = vadd.f32 %v486, 1.0
  %v490 = vadd.f32 %v488, 1.0
  %v491 = vrcp.pop %v489
  %v492 = vmul.f32 %v489, %v491
  %v493 = vsub.f32 1.0, %v492
  %v494 = vmul.f32 %v491, %v493
  %v495 = vadd.f32 %v491, %v494
  %vm496 = vweird.f32 %v489
  %vm497 = vweird.f32 %v491
  %vm498 = vmor %vm496, %vm497
  %v499 = vsel %vm498, %v491, %v495
  %v500 = vand.u32 2147483647, %v489
  %vm501 = vcmp.eq.f32.partialorder %v500, 8.507059e+37
  %v502 = vand.u32 %v489, 2147483648
  %v503 = vor.u32 1.1754944e-38, %v502
  %v504 = vsel %vm501, %v503, %v499
  %v505 = vmul.f32 1.0, %v504
  %v506 = vrcp.pop %v490
  %v507 = vmul.f32 %v490, %v506
  %v508 = vsub.f32 1.0, %v507
  %v509 = vmul.f32 %v506, %v508
  %v510 = vadd.f32 %v506, %v509
  %vm511 = vweird.f32 %v490
  %vm512 = vweird.f32 %v506
  %vm513 = vmor %vm511, %vm512
  %v514 = vsel %vm513, %v506, %v510
  %v515 = vand.u32 2147483647, %v490
  %vm516 = vcmp.eq.f32.partialorder %v515, 8.507059e+37
  %v517 = vand.u32 %v490, 2147483648
  %v518 = vor.u32 1.1754944e-38, %v517
  %v519 = vsel %vm516, %v518, %v514
  %v520 = vmul.f32 1.0, %v519
  %v521 = vmul.f32 %v358, %v505
  %v522 = vmul.f32 %v359, %v520
  %v523 = vld [vmem:[%s4] sm:$0xf]
  %v524 = vld [vmem:[%s4 + $0x4] sm:$0xf]
  %v525 = vld [vmem:[%s4 + $0x8] sm:$0xf]
  %v526 = vld [vmem:[%s4 + $0xc] sm:$0xf]
  %v527 = vpack.c.bf16 %v522, %v521
  %528 = vset.pattern.permute.xlu0 4
  %529 = vperm.xlu0 %528, %v77
  %v530 = vpop.permute.xlu0 %529
  %532 = vset.pattern.permute.xlu0 4
  %533 = vperm.xlu0 %532, %v78
  %v534 = vpop.permute.xlu0 %533
  %537 = vset.pattern.permute.xlu0 4
  %538 = vperm.xlu0 %537, %v79
  %v539 = vpop.permute.xlu0 %538
  %542 = vset.pattern.permute.xlu0 4
  %543 = vperm.xlu0 %542, %v80
  %v544 = vpop.permute.xlu0 %543
  %v550 = vunpack.c.l.b16 %v523
  %v551 = vunpack.c.l.b16 %v524
  %v552 = vunpack.c.l.b16 %v525
  %v553 = vunpack.c.l.b16 %v526
  %v554 = vpack.c.b16 %v551, %v550
  %v555 = vpack.c.b16 %v553, %v552
  %v557 = vsel %vm119, %v554, 0
  %v560 = vsel %vm119, %v555, 0
  %562 = vmatpush.bf16.msra.mxu0 0
  %563 = vmatpush.bf16.msra.mxu0 0
  %564 = vmatpush.bf16.msra.mxu0 0
  %565 = vmatpush.bf16.msra.mxu0 0
  %566 = vmatpush.bf16.msra.mxu0 0
  %567 = vmatpush.bf16.msra.mxu0 0
  %568 = vmatpush.bf16.msra.mxu0 0
  %569 = vmatpush.bf16.msra.mxu0 %v527
  %570 = vmatmul.bf16.gmra.mxu0 %v557
  %v571 = vpop.f32.mrf.mxu0
  %v572 = vadd.f32 %v530, %v571
  %v573 = vpop.f32.mrf.mxu0
  %v574 = vadd.f32 %v534, %v573
  %575 = vmatmul.bf16.gmra.mxu0 %v560
  %v576 = vpop.f32.mrf.mxu0
  %v577 = vadd.f32 %v539, %v576
  %v578 = vpop.f32.mrf.mxu0
  %v579 = vadd.f32 %v544, %v578
  %580 = vdwg.mxu0
  %v581 = vmax.f32 %v572, 0.0
  %v582 = vmax.f32 %v574, 0.0
  %v583 = vmax.f32 %v577, 0.0
  %v584 = vmax.f32 %v579, 0.0
  %v585 = vld [vmem:[%s7] sm:$0xf]
  %v586 = vld [vmem:[%s7 + $0x4] sm:$0xf]
  %v587 = vld [vmem:[%s7 + $0x8] sm:$0xf]
  %v588 = vld [vmem:[%s7 + $0xc] sm:$0xf]
  %589 = vset.pattern.permute.xlu0 5
  %590 = vperm.xlu0 %589, %v77
  %v591 = vpop.permute.xlu0 %590
  %593 = vset.pattern.permute.xlu0 5
  %594 = vperm.xlu0 %593, %v78
  %v595 = vpop.permute.xlu0 %594
  %597 = vset.pattern.permute.xlu0 5
  %598 = vperm.xlu0 %597, %v79
  %v599 = vpop.permute.xlu0 %598
  %601 = vset.pattern.permute.xlu0 5
  %602 = vperm.xlu0 %601, %v80
  %v603 = vpop.permute.xlu0 %602
  %v609 = vunpack.c.l.b16 %v585
  %v610 = vunpack.c.l.b16 %v586
  %v611 = vunpack.c.l.b16 %v587
  %v612 = vunpack.c.l.b16 %v588
  %v613 = vpack.c.b16 %v610, %v609
  %v614 = vpack.c.b16 %v612, %v611
  %v616 = vsel %vm119, %v613, 0
  %v619 = vsel %vm119, %v614, 0
  %621 = vmatpush.bf16.msra.mxu0 0
  %622 = vmatpush.bf16.msra.mxu0 0
  %623 = vmatpush.bf16.msra.mxu0 0
  %624 = vmatpush.bf16.msra.mxu0 0
  %625 = vmatpush.bf16.msra.mxu0 0
  %626 = vmatpush.bf16.msra.mxu0 0
  %627 = vmatpush.bf16.msra.mxu0 0
  %628 = vmatpush.bf16.msra.mxu0 %v111
  %629 = vmatmul.bf16.gmra.mxu0 %v616
  %v630 = vpop.f32.mrf.mxu0
  %v631 = vadd.f32 %v591, %v630
  %v632 = vpop.f32.mrf.mxu0
  %v633 = vadd.f32 %v595, %v632
  %634 = vmatmul.bf16.gmra.mxu0 %v619
  %v635 = vpop.f32.mrf.mxu0
  %v636 = vadd.f32 %v599, %v635
  %v637 = vpop.f32.mrf.mxu0
  %v638 = vadd.f32 %v603, %v637
  %639 = vdwg.mxu0
  %v640 = vadd.f32 %v581, %v631
  %v641 = vadd.f32 %v582, %v633
  %v642 = vadd.f32 %v583, %v636
  %v643 = vadd.f32 %v584, %v638
  %v644 = vmax.f32 %v640, 0.0
  %v645 = vmax.f32 %v641, 0.0
  %v646 = vmax.f32 %v642, 0.0
  %v647 = vmax.f32 %v643, 0.0
  %v648 = vld [vmem:[%s15] sm:$0xff]
  %v649 = vld [vmem:[%s15 + $0x8] sm:$0xff]
  %v650 = vld [vmem:[%s15 + $0x10] sm:$0xff]
  %v651 = vld [vmem:[%s15 + $0x18] sm:$0xff]
  %v652 = vld [vmem:[%s16] sm:$0xf]
  %v653 = vld [vmem:[%s16 + $0x4] sm:$0x1]
  %v654 = vld [vmem:[%s10] sm:$0xf]
  %v655 = vld [vmem:[%s10 + $0x4] sm:$0xf]
  %v656 = vpack.c.bf16 %v645, %v644
  %v657 = vpack.c.bf16 %v647, %v646
  %659 = vset.pattern.permute.xlu0 0
  %660 = vperm.xlu0 %659, %v648
  %v661 = vpop.permute.xlu0 %660
  %664 = vset.pattern.permute.xlu0 0
  %665 = vperm.xlu0 %664, %v649
  %v666 = vpop.permute.xlu0 %665
  %v670 = vunpack.c.l.b16 %v654
  %v671 = vunpack.c.l.b16 %v655
  %v672 = vpack.c.b16 %v671, %v670
  %vm673 = vcmask 261120
  %v675 = vsel %vm673, %v672, 0
  %677 = vmatpush.bf16.msra.mxu0 0
  %678 = vmatpush.bf16.msra.mxu0 0
  %679 = vmatpush.bf16.msra.mxu0 0
  %680 = vmatpush.bf16.msra.mxu0 0
  %681 = vmatpush.bf16.msra.mxu0 0
  %682 = vmatpush.bf16.msra.mxu0 0
  %683 = vmatpush.bf16.msra.mxu0 %v657
  %684 = vmatpush.bf16.msra.mxu0 %v656
  %685 = vmatmul.bf16.gmra.mxu0 %v675
  %v686 = vpop.f32.mrf.mxu0
  %v687 = vadd.f32 %v661, %v686
  %v688 = vpop.f32.mrf.mxu0
  %v689 = vadd.f32 %v666, %v688
  %690 = vdwg.mxu0
  %v691 = vmax.f32 %v687, 0.0
  %v692 = vmax.f32 %v689, 0.0
  %v693 = vpack.c.bf16 %v691, %v691
  %v694 = vpack.c.bf16 %v692, %v692
  %v697 = vunpack.c.l.b16 %v693
  %v698 = vunpack.c.l.b16 %v694
  %v699 = vpack.c.b16 %v698, %v697
  %700 = vrot.lane.b32.xlu0 %v699, 9
  %v701 = vpop.permute.xlu0 %700
  %v705 = vpack.i.b16 %v652, %v652
  %v707 = vperm.slane %v705, 0
  %v708 = vunpack.c.l.bf16 %v701
  %v709 = vunpack.c.h.bf16 %v701
  %v710 = vunpack.c.l.bf16 %v707
  %v711 = vmul.f32 %v708, %v710
  %v712 = vmul.f32 %v709, %v710
  %v713 = vpack.c.bf16 %v711, %v711
  %v714 = vpack.c.bf16 %v712, %v712
  %715 = vrot.lane.b32.xlu0 %v699, 8
  %v716 = vpop.permute.xlu0 %715
  %v719 = vshrl.u32 %v652, 16
  %v720 = vpack.i.b16 %v719, %v719
  %v722 = vperm.slane %v720, 0
  %v723 = vunpack.c.l.bf16 %v716
  %v724 = vunpack.c.h.bf16 %v716
  %v725 = vunpack.c.l.bf16 %v722
  %v726 = vmul.f32 %v723, %v725
  %v727 = vmul.f32 %v724, %v725
  %v728 = vpack.c.bf16 %v726, %v726
  %v729 = vpack.c.bf16 %v727, %v727
  %730 = vrot.lane.b32.xlu0 %v699, 7
  %v731 = vpop.permute.xlu0 %730
  %v734 = vperm.slane %v705, 1
  %v735 = vunpack.c.l.bf16 %v731
  %v736 = vunpack.c.h.bf16 %v731
  %v737 = vunpack.c.l.bf16 %v734
  %v738 = vmul.f32 %v735, %v737
  %v739 = vmul.f32 %v736, %v737
  %v740 = vpack.c.bf16 %v738, %v738
  %v741 = vpack.c.bf16 %v739, %v739
  %742 = vrot.lane.b32.xlu0 %v699, 1
  %v743 = vpop.permute.xlu0 %742
  %v746 = vperm.slane %v720, 1
  %v747 = vunpack.c.l.bf16 %v743
  %v748 = vunpack.c.h.bf16 %v743
  %v749 = vunpack.c.l.bf16 %v746
  %v750 = vmul.f32 %v747, %v749
  %v751 = vmul.f32 %v748, %v749
  %v752 = vpack.c.bf16 %v750, %v750
  %v753 = vpack.c.bf16 %v751, %v751
  %754 = vrot.lane.b32.xlu0 %v699, 127
  %v755 = vpop.permute.xlu0 %754
  %v758 = vperm.slane %v720, 2
  %v759 = vunpack.c.l.bf16 %v755
  %v760 = vunpack.c.h.bf16 %v755
  %v761 = vunpack.c.l.bf16 %v758
  %v762 = vmul.f32 %v759, %v761
  %v763 = vmul.f32 %v760, %v761
  %v764 = vpack.c.bf16 %v762, %v762
  %v765 = vpack.c.bf16 %v763, %v763
  %766 = vrot.lane.b32.xlu0 %v699, 121
  %v767 = vpop.permute.xlu0 %766
  %v770 = vperm.slane %v705, 3
  %v771 = vunpack.c.l.bf16 %v767
  %v772 = vunpack.c.h.bf16 %v767
  %v773 = vunpack.c.l.bf16 %v770
  %v774 = vmul.f32 %v771, %v773
  %v775 = vmul.f32 %v772, %v773
  %v776 = vpack.c.bf16 %v774, %v774
  %v777 = vpack.c.bf16 %v775, %v775
  %778 = vrot.lane.b32.xlu0 %v699, 120
  %v779 = vpop.permute.xlu0 %778
  %v782 = vperm.slane %v720, 3
  %v783 = vunpack.c.l.bf16 %v779
  %v784 = vunpack.c.h.bf16 %v779
  %v785 = vunpack.c.l.bf16 %v782
  %v786 = vmul.f32 %v783, %v785
  %v787 = vmul.f32 %v784, %v785
  %v788 = vpack.c.bf16 %v786, %v786
  %v789 = vpack.c.bf16 %v787, %v787
  %790 = vrot.lane.b32.xlu0 %v699, 119
  %v791 = vpop.permute.xlu0 %790
  %v795 = vpack.i.b16 %v653, %v653
  %v797 = vperm.slane %v795, 0
  %v798 = vunpack.c.l.bf16 %v791
  %v799 = vunpack.c.h.bf16 %v791
  %v800 = vunpack.c.l.bf16 %v797
  %v801 = vmul.f32 %v798, %v800
  %v802 = vmul.f32 %v799, %v800
  %v803 = vpack.c.bf16 %v801, %v801
  %v804 = vpack.c.bf16 %v802, %v802
  %v807 = vunpack.c.l.b16 %v713
  %v808 = vunpack.c.l.b16 %v714
  %v809 = vpack.c.b16 %v808, %v807
  %v813 = vunpack.c.l.b16 %v728
  %v814 = vunpack.c.l.b16 %v729
  %v815 = vpack.c.b16 %v814, %v813
  %v819 = vunpack.c.l.b16 %v740
  %v820 = vunpack.c.l.b16 %v741
  %v821 = vpack.c.b16 %v820, %v819
  %v825 = vunpack.c.l.b16 %v752
  %v826 = vunpack.c.l.b16 %v753
  %v827 = vpack.c.b16 %v826, %v825
  %v832 = vunpack.c.l.b16 %v764
  %v833 = vunpack.c.l.b16 %v765
  %v834 = vpack.c.b16 %v833, %v832
  %v838 = vunpack.c.l.b16 %v776
  %v839 = vunpack.c.l.b16 %v777
  %v840 = vpack.c.b16 %v839, %v838
  %v844 = vunpack.c.l.b16 %v788
  %v845 = vunpack.c.l.b16 %v789
  %v846 = vpack.c.b16 %v845, %v844
  %v850 = vunpack.c.l.b16 %v803
  %v851 = vunpack.c.l.b16 %v804
  %v852 = vpack.c.b16 %v851, %v850
  %v854 = vld [vmem:[%s11] sm:$0xff]
  %v855 = vld [vmem:[%s11 + $0x8] sm:$0xff]
  %856 = vset.pattern.permute.xlu0 1
  %857 = vperm.xlu0 %856, %v648
  %v858 = vpop.permute.xlu0 %857
  %860 = vset.pattern.permute.xlu0 1
  %861 = vperm.xlu0 %860, %v649
  %v862 = vpop.permute.xlu0 %861
  %v866 = vunpack.c.l.b16 %v854
  %v867 = vunpack.c.h.b16 %v854
  %v868 = vunpack.c.l.b16 %v855
  %v869 = vunpack.c.h.b16 %v855
  %v870 = vpack.c.b16 %v868, %v866
  %v871 = vpack.c.b16 %v869, %v867
  %v874 = vsel %vm119, %v871, 0
  %876 = vmatpush.bf16.msra.mxu0 %v846
  %877 = vmatpush.bf16.msra.mxu0 %v840
  %878 = vmatpush.bf16.msra.mxu0 %v834
  %879 = vmatpush.bf16.msra.mxu0 %v699
  %880 = vmatpush.bf16.msra.mxu0 %v827
  %881 = vmatpush.bf16.msra.mxu0 %v821
  %882 = vmatpush.bf16.msra.mxu0 %v815
  %883 = vmatpush.bf16.msra.mxu0 %v809
  %884 = vmatmul.bf16.gmra.mxu0 %v870
  %v885 = vpop.f32.mrf.mxu0
  %v886 = vadd.f32 %v858, %v885
  %v887 = vpop.f32.mrf.mxu0
  %v888 = vadd.f32 %v862, %v887
  %889 = vdwg.mxu0
  %890 = vmatpush.bf16.msra.mxu0 0
  %891 = vmatpush.bf16.msra.mxu0 0
  %892 = vmatpush.bf16.msra.mxu0 0
  %893 = vmatpush.bf16.msra.mxu0 0
  %894 = vmatpush.bf16.msra.mxu0 0
  %895 = vmatpush.bf16.msra.mxu0 0
  %896 = vmatpush.bf16.msra.mxu0 0
  %897 = vmatpush.bf16.msra.mxu0 %v852
  %898 = vmatmul.bf16.gmra.mxu0 %v874
  %v899 = vpop.f32.mrf.mxu0
  %v900 = vadd.f32 %v886, %v899
  %v901 = vpop.f32.mrf.mxu0
  %v902 = vadd.f32 %v888, %v901
  %903 = vdwg.mxu0
  %v904 = vmax.f32 %v900, 0.0
  %v905 = vmax.f32 %v902, 0.0
  %v906 = vpack.c.bf16 %v905, %v904
  %907 = vmatpush.bf16.msra.mxu0 %v400
  %908 = vmatpush.bf16.msra.mxu0 %v399
  %909 = vmatpush.bf16.msra.mxu0 %v398
  %910 = vmatpush.bf16.msra.mxu0 %v397
  %911 = vmatpush.bf16.msra.mxu0 %v396
  %912 = vmatpush.bf16.msra.mxu0 %v395
  %913 = vmatpush.bf16.msra.mxu0 %v394
  %914 = vmatpush.bf16.msra.mxu0 %v393
  %915 = vmatmul.bf16.gmra.mxu0 %v906
  %v916 = vpop.f32.mrf.mxu0
  %v917 = vadd.f32 0.0, %v916
  %v918 = vpop.f32.mrf.mxu0
  %v919 = vadd.f32 0.0, %v918
  %920 = vdwg.mxu0
  %v921 = vld [vmem:[%s13] sm:$0xf]
  %v922 = vpack.c.bf16 %v919, %v917
  %923 = vset.pattern.permute.xlu0 2
  %924 = vperm.xlu0 %923, %v648
  %v925 = vpop.permute.xlu0 %924
  %v928 = vsel %vm119, %v921, 0
  %930 = vmatpush.bf16.msra.mxu0 0
  %931 = vmatpush.bf16.msra.mxu0 0
  %932 = vmatpush.bf16.msra.mxu0 0
  %933 = vmatpush.bf16.msra.mxu0 0
  %934 = vmatpush.bf16.msra.mxu0 0
  %935 = vmatpush.bf16.msra.mxu0 0
  %936 = vmatpush.bf16.msra.mxu0 0
  %937 = vmatpush.bf16.msra.mxu0 %v922
  %938 = vmatmul.bf16.gmra.mxu0 %v928
  %v939 = vpop.f32.mrf.mxu0
  %v940 = vadd.f32 %v925, %v939
  %v941 = vpop.f32.mrf.mxu0
  %942 = vdwg.mxu0
  %v943 = vmax.f32 %v940, 0.0
  %v944 = vld [vmem:[%s14] sm:$0xf]
  %v945 = vld [vmem:[%s14 + $0x4] sm:$0xf]
  %v946 = vpack.c.bf16 %v943, %v943
  %947 = vset.pattern.permute.xlu0 3
  %948 = vperm.xlu0 %947, %v648
  %v949 = vpop.permute.xlu0 %948
  %951 = vset.pattern.permute.xlu0 3
  %952 = vperm.xlu0 %951, %v649
  %v953 = vpop.permute.xlu0 %952
  %v957 = vunpack.c.l.b16 %v944
  %v958 = vunpack.c.l.b16 %v945
  %v959 = vpack.c.b16 %v958, %v957
  %v961 = vsel %vm216, %v959, 0
  %v964 = vsel %vm465, %v946, 0
  %966 = vmatpush.bf16.msra.mxu0 0
  %967 = vmatpush.bf16.msra.mxu0 0
  %968 = vmatpush.bf16.msra.mxu0 0
  %969 = vmatpush.bf16.msra.mxu0 0
  %970 = vmatpush.bf16.msra.mxu0 0
  %971 = vmatpush.bf16.msra.mxu0 0
  %972 = vmatpush.bf16.msra.mxu0 0
  %973 = vmatpush.bf16.msra.mxu0 %v964
  %974 = vmatmul.bf16.gmra.mxu0 %v961
  %v975 = vpop.f32.mrf.mxu0
  %v976 = vadd.f32 %v949, %v975
  %v977 = vpop.f32.mrf.mxu0
  %v978 = vadd.f32 %v953, %v977
  %979 = vdwg.mxu0
  %v980 = vxor.u32 %v976, 2147483648
  %v981 = vxor.u32 %v978, 2147483648
  %v982 = vmul.f32 %v980, 1.442695
  %v983 = vpow.pop %v982
  %v984 = vmul.f32 %v981, 1.442695
  %v985 = vpow.pop %v984
  %v986 = vadd.f32 %v983, 1.0
  %v987 = vadd.f32 %v985, 1.0
  %v988 = vrcp.pop %v986
  %v989 = vmul.f32 %v986, %v988
  %v990 = vsub.f32 1.0, %v989
  %v991 = vmul.f32 %v988, %v990
  %v992 = vadd.f32 %v988, %v991
  %vm993 = vweird.f32 %v986
  %vm994 = vweird.f32 %v988
  %vm995 = vmor %vm993, %vm994
  %v996 = vsel %vm995, %v988, %v992
  %v997 = vand.u32 2147483647, %v986
  %vm998 = vcmp.eq.f32.partialorder %v997, 8.507059e+37
  %v999 = vand.u32 %v986, 2147483648
  %v1000 = vor.u32 1.1754944e-38, %v999
  %v1001 = vsel %vm998, %v1000, %v996
  %v1002 = vmul.f32 1.0, %v1001
  %v1003 = vrcp.pop %v987
  %v1004 = vmul.f32 %v987, %v1003
  %v1005 = vsub.f32 1.0, %v1004
  %v1006 = vmul.f32 %v1003, %v1005
  %v1007 = vadd.f32 %v1003, %v1006
  %vm1008 = vweird.f32 %v987
  %vm1009 = vweird.f32 %v1003
  %vm1010 = vmor %vm1008, %vm1009
  %v1011 = vsel %vm1010, %v1003, %v1007
  %v1012 = vand.u32 2147483647, %v987
  %vm1013 = vcmp.eq.f32.partialorder %v1012, 8.507059e+37
  %v1014 = vand.u32 %v987, 2147483648
  %v1015 = vor.u32 1.1754944e-38, %v1014
  %v1016 = vsel %vm1013, %v1015, %v1011
  %v1017 = vmul.f32 1.0, %v1016
  %v1018 = vmul.f32 %v904, %v1002
  %v1019 = vmul.f32 %v905, %v1017
  %v1020 = vld [vmem:[%s12] sm:$0xf]
  %v1021 = vld [vmem:[%s12 + $0x4] sm:$0xf]
  %v1022 = vld [vmem:[%s12 + $0x8] sm:$0xf]
  %v1023 = vld [vmem:[%s12 + $0xc] sm:$0xf]
  %v1024 = vpack.c.bf16 %v1019, %v1018
  %1025 = vset.pattern.permute.xlu0 4
  %1026 = vperm.xlu0 %1025, %v648
  %v1027 = vpop.permute.xlu0 %1026
  %1029 = vset.pattern.permute.xlu0 4
  %1030 = vperm.xlu0 %1029, %v649
  %v1031 = vpop.permute.xlu0 %1030
  %1034 = vset.pattern.permute.xlu0 4
  %1035 = vperm.xlu0 %1034, %v650
  %v1036 = vpop.permute.xlu0 %1035
  %1039 = vset.pattern.permute.xlu0 4
  %1040 = vperm.xlu0 %1039, %v651
  %v1041 = vpop.permute.xlu0 %1040
  %v1047 = vunpack.c.l.b16 %v1020
  %v1048 = vunpack.c.l.b16 %v1021
  %v1049 = vunpack.c.l.b16 %v1022
  %v1050 = vunpack.c.l.b16 %v1023
  %v1051 = vpack.c.b16 %v1048, %v1047
  %v1052 = vpack.c.b16 %v1050, %v1049
  %v1054 = vsel %vm119, %v1051, 0
  %v1057 = vsel %vm119, %v1052, 0
  %1059 = vmatpush.bf16.msra.mxu0 0
  %1060 = vmatpush.bf16.msra.mxu0 0
  %1061 = vmatpush.bf16.msra.mxu0 0
  %1062 = vmatpush.bf16.msra.mxu0 0
  %1063 = vmatpush.bf16.msra.mxu0 0
  %1064 = vmatpush.bf16.msra.mxu0 0
  %1065 = vmatpush.bf16.msra.mxu0 0
  %1066 = vmatpush.bf16.msra.mxu0 %v1024
  %1067 = vmatmul.bf16.gmra.mxu0 %v1054
  %v1068 = vpop.f32.mrf.mxu0
  %v1069 = vadd.f32 %v1027, %v1068
  %v1070 = vpop.f32.mrf.mxu0
  %v1071 = vadd.f32 %v1031, %v1070
  %1072 = vmatmul.bf16.gmra.mxu0 %v1057
  %v1073 = vpop.f32.mrf.mxu0
  %v1074 = vadd.f32 %v1036, %v1073
  %v1075 = vpop.f32.mrf.mxu0
  %v1076 = vadd.f32 %v1041, %v1075
  %1077 = vdwg.mxu0
  %v1078 = vmax.f32 %v1069, 0.0
  %v1079 = vmax.f32 %v1071, 0.0
  %v1080 = vmax.f32 %v1074, 0.0
  %v1081 = vmax.f32 %v1076, 0.0
  %v1082 = vadd.f32 %v1078, %v644
  %v1083 = vadd.f32 %v1079, %v645
  %v1084 = vadd.f32 %v1080, %v646
  %v1085 = vadd.f32 %v1081, %v647
  %v1086 = vmax.f32 %v1082, 0.0
  %v1087 = vmax.f32 %v1083, 0.0
  %v1088 = vmax.f32 %v1084, 0.0
  %v1089 = vmax.f32 %v1085, 0.0
  %1090 = vst [vmem:[%s17] sm:$0xff] %v1086
  %1091 = vst [vmem:[%s17 + $0x8] sm:$0xff] %v1087
  %1092 = vst [vmem:[%s17 + $0x10] sm:$0xff] %v1088
  %1093 = vst [vmem:[%s17 + $0x18] sm:$0xff] %v1089
  // Predicated region
  $region70: #{stage_forward.1} parent=0 // pred_check
    _
  $region71: #{stage_forward.1} parent=0 // pred_check_branch
    %1095 = sbr.rel (0) target = $region73
  $region72: #{stage_forward.1} parent=0 // pred_region
    _
  $region73: #{stage_forward.1} parent=0 // pred_fallthru
    _
  // Predicated region
  $region74: #{stage_forward.1} parent=0 // pred_check
    _
  $region75: #{stage_forward.1} parent=0 // pred_check_branch
    %1097 = sbr.rel (0) target = $region77
  $region76: #{stage_forward.1} parent=0 // pred_region
    _
  $region77: #{stage_forward.1} parent=0 // pred_fallthru
    _

</llo_original>
